<compile_context>
chip_gen: v5e
topology: v5e:2x2
jax: 0.10.0
libtpu: 0.0.40
codegen_flags: <defaults>
</compile_context>

<pallas_src>
import functools
import math

import numpy as np
import jax
import jax.numpy as jnp
from jax.experimental import pallas as pl
from jax.experimental.pallas import tpu as pltpu

NUM_HEADS = 8
COMPUTE_DTYPE = jnp.float32          # jnp.bfloat16 recommended on v5e/v6e/v7x
VMEM_LIMIT_BYTES = 48 * 1024 * 1024  # above 16/32 MiB defaults, < v7x physical


def _pick_group_block(num_groups, rows_per_group, max_rows=256):
    """Pick how many whole groups (attention batches / conv batches) go into
    one grid step.  The row block must be a multiple of 8 sublanes (or the
    whole array).  Prefer the largest block within the row budget that still
    leaves >= 2 grid steps (v7x megacore sharding)."""
    legal = [t for t in range(1, num_groups + 1)
             if num_groups % t == 0
             and (t == num_groups or (t * rows_per_group) % 8 == 0)]
    within = [t for t in legal if t * rows_per_group <= max_rows]
    if not within:
        return min(legal)
    multi = [t for t in within if num_groups // t >= 2]
    return max(multi) if multi else max(within)


# ----------------------------------------------------------------------------
# Kernel 1: the full multi-head self-attention stack (all layers fused).
# Activations are 2D: rows = (attention-batch s, position b), cols = E.
# grid = (S // TN,); each step handles TN attention batches (= TN*L rows).
# Attention inside the block is done densely per head with a block-diagonal
# mask bias, so there is no per-batch loop and no VMEM scratch.
# ----------------------------------------------------------------------------
def _attn_stack_kernel(o_ref, mask_ref, wqkv_ref, bqkv_ref, wo_ref, bo_ref,
                       out_ref, *, num_layers, num_heads, scale,
                       compute_dtype):
    R, E = o_ref.shape
    H = num_heads
    D = E // H

    mask_bias = mask_ref[...]                       # (R, R): 0 / -1e30
    o = o_ref[...]                                  # (R, E) f32

    for l in range(num_layers):
        wqkv = wqkv_ref[l].astype(compute_dtype)    # (E, 3E)
        bqkv = bqkv_ref[l]                          # (1, 3E)
        wo = wo_ref[l].astype(compute_dtype)        # (E, E)
        bo = bo_ref[l]                              # (1, E)

        # Fused QKV projection: one MXU matmul with K = E.
        qkv = jnp.dot(o.astype(compute_dtype), wqkv,
                      preferred_element_type=jnp.float32) + bqkv     # (R, 3E)

        heads = []
        for h in range(H):
            q = qkv[:, h * D:(h + 1) * D].astype(compute_dtype)      # (R, D)
            k = qkv[:, E + h * D:E + (h + 1) * D].astype(compute_dtype)
            v = qkv[:, 2 * E + h * D:2 * E + (h + 1) * D].astype(compute_dtype)
            # Dense (R, R) scores + block-diagonal mask == per-batch attention.
            s = jnp.einsum("md,nd->mn", q, k,
                           preferred_element_type=jnp.float32) * scale
            s = s + mask_bias
            s = s - jnp.max(s, axis=-1, keepdims=True)
            p = jnp.exp(s)
            p = p * pl.reciprocal(jnp.sum(p, axis=-1, keepdims=True),
                                  approx=True)
            heads.append(jnp.dot(p.astype(compute_dtype), v,
                                 preferred_element_type=jnp.float32))  # (R, D)

        attn = jnp.concatenate(heads, axis=-1)                         # (R, E)
        # Single out-projection (K = E) + bias + residual.
        o = jnp.dot(attn.astype(compute_dtype), wo,
                    preferred_element_type=jnp.float32) + bo + o

    out_ref[...] = o


def attention_stack(o2d, wqkv_all, bqkv_all, wo_all, bo_all, *, att_len,
                    num_heads=NUM_HEADS, compute_dtype=COMPUTE_DTYPE):
    R_total, E = o2d.shape
    L = att_len                       # attention sequence length (= batch dim)
    N = R_total // L                  # number of independent attention batches
    D = E // num_heads
    num_layers = wqkv_all.shape[0]

    TN = _pick_group_block(N, L, max_rows=256)
    rows = TN * L

    # Block-diagonal mask bias (rows in the same attention batch interact);
    # built host-side once (baked constant under jit), so no in-kernel iota/div.
    groups = np.arange(rows) // L
    mask_bias = jnp.asarray(
        np.where(groups[:, None] == groups[None, :], 0.0, -1e30),
        dtype=jnp.float32)

    kernel = functools.partial(_attn_stack_kernel, num_layers=num_layers,
                               num_heads=num_heads, scale=1.0 / math.sqrt(D),
                               compute_dtype=compute_dtype)
    const2 = lambda i: (0, 0)
    const3 = lambda i: (0, 0, 0)
    return pl.pallas_call(
        kernel,
        out_shape=jax.ShapeDtypeStruct((R_total, E), jnp.float32),
        grid=(N // TN,),
        in_specs=[
            pl.BlockSpec((rows, E), lambda i: (i, 0)),        # activations
            pl.BlockSpec((rows, rows), const2),               # mask bias
            pl.BlockSpec((num_layers, E, 3 * E), const3),     # stacked QKV W^T
            pl.BlockSpec((num_layers, 1, 3 * E), const3),     # stacked QKV b
            pl.BlockSpec((num_layers, E, E), const3),         # stacked out W^T
            pl.BlockSpec((num_layers, 1, E), const3),         # stacked out b
        ],
        out_specs=pl.BlockSpec((rows, E), lambda i: (i, 0)),
        compiler_params=pltpu.CompilerParams(
            dimension_semantics=("parallel",),
            vmem_limit_bytes=VMEM_LIMIT_BYTES),
    )(o2d, mask_bias, wqkv_all, bqkv_all, wo_all, bo_all)


# ----------------------------------------------------------------------------
# Kernel 2: Linear(inner_div -> d_model) fused with the circular Conv1d over
# channels = seq_len, length = d_model.  The +/-1 circular shifts are folded
# into pre-rolled Linear weight columns (done once at prepare time), the
# Linear bias is folded through the conv into one (S, M) constant, and the
# conv is three accumulating (S, S) @ (S, M) matmuls (no concat / relayout).
# grid = (B // TB,); rows = (b, s).
# ----------------------------------------------------------------------------
def _linear_circconv_kernel(x_ref, wl3_ref, wc_ref, bias_ref, out_ref,
                            *, seq_len, compute_dtype):
    R, E = x_ref.shape                # R = TB * seq_len
    S = seq_len
    TB = R // S
    M = out_ref.shape[1]

    # One fused Linear matmul for the whole row block.
    # Columns [0:M) = y_prev, [M:2M) = y, [2M:3M) = y_next (biases folded out).
    y3 = jnp.dot(x_ref[...].astype(compute_dtype),
                 wl3_ref[...].astype(compute_dtype),
                 preferred_element_type=jnp.float32)                 # (R, 3M)

    # Hoisted out of the per-batch loop: conv taps and the fused bias.
    wc0 = wc_ref[0].astype(compute_dtype)                            # (S, S)
    wc1 = wc_ref[1].astype(compute_dtype)
    wc2 = wc_ref[2].astype(compute_dtype)
    bias = bias_ref[...]                                             # (S, M)

    for b in range(TB):
        rows = slice(b * S, (b + 1) * S)
        yb = y3[rows, :]                                             # (S, 3M)
        out_ref[rows, :] = (
            jnp.dot(wc0, yb[:, :M].astype(compute_dtype),
                    preferred_element_type=jnp.float32)
            + jnp.dot(wc1, yb[:, M:2 * M].astype(compute_dtype),
                      preferred_element_type=jnp.float32)
            + jnp.dot(wc2, yb[:, 2 * M:].astype(compute_dtype),
                      preferred_element_type=jnp.float32)
            + bias)


def linear_circconv(x2d, wl3, wc_taps, bias_sm, *, seq_len,
                    compute_dtype=COMPUTE_DTYPE):
    R_total, E = x2d.shape
    S = seq_len
    B = R_total // S
    M = wl3.shape[1] // 3

    TB = _pick_group_block(B, S, max_rows=512)
    rows = TB * S
    kernel = functools.partial(_linear_circconv_kernel, seq_len=S,
                               compute_dtype=compute_dtype)
    const2 = lambda b: (0, 0)
    const3 = lambda b: (0, 0, 0)
    return pl.pallas_call(
        kernel,
        out_shape=jax.ShapeDtypeStruct((R_total, M), jnp.float32),
        grid=(B // TB,),
        in_specs=[
            pl.BlockSpec((rows, E), lambda b: (b, 0)),        # activations
            pl.BlockSpec((E, 3 * M), const2),                 # pre-rolled W
            pl.BlockSpec((3, S, S), const3),                  # conv taps
            pl.BlockSpec((S, M), const2),                     # fused bias
        ],
        out_specs=pl.BlockSpec((rows, M), lambda b: (b, 0)),
        compiler_params=pltpu.CompilerParams(
            dimension_semantics=("parallel",),
            vmem_limit_bytes=VMEM_LIMIT_BYTES),
    )(x2d, wl3, wc_taps, bias_sm)


# ----------------------------------------------------------------------------
# One-time weight preparation (item 12): transposes, layer stacking, circular
# shift folding, conv tap splitting and bias fusion happen once, not per call.
# ----------------------------------------------------------------------------
def prepare_params(params):
    attn = params["attn"]
    wqkv_all = jnp.stack([jnp.transpose(w) for (w, _, _, _) in attn])   # (Lyr,E,3E)
    bqkv_all = jnp.stack([b.reshape(1, -1) for (_, b, _, _) in attn])   # (Lyr,1,3E)
    wo_all = jnp.stack([jnp.transpose(w) for (_, _, w, _) in attn])     # (Lyr,E,E)
    bo_all = jnp.stack([b.reshape(1, -1) for (_, _, _, b) in attn])     # (Lyr,1,E)

    wl, bl = params["linear"]                       # (M, E), (M,)
    wc, bc = params["conv"]                         # (S, S, 3), (S,)
    wl_t = jnp.transpose(wl)                        # (E, M)
    # roll(x @ W^T, k, axis=-1) == x @ roll(W^T, k, axis=1)
    wl3 = jnp.concatenate([jnp.roll(wl_t, 1, axis=1), wl_t,
                           jnp.roll(wl_t, -1, axis=1)], axis=1)         # (E, 3M)
    wc_taps = jnp.stack([wc[:, :, 0], wc[:, :, 1], wc[:, :, 2]])        # (3, S, S)
    bl_taps = jnp.stack([jnp.roll(bl, 1), bl, jnp.roll(bl, -1)])        # (3, M)
    # Linear bias pushed through the conv + conv bias, as one (S, M) constant.
    rowsum = jnp.sum(wc_taps, axis=2)                                   # (3, S)
    bias_sm = jnp.einsum("kt,km->tm", rowsum, bl_taps) + bc[:, None]    # (S, M)
    return {"wqkv": wqkv_all, "bqkv": bqkv_all, "wo": wo_all, "bo": bo_all,
            "wl3": wl3, "wc": wc_taps, "bias_sm": bias_sm}


# ----------------------------------------------------------------------------
# Full forward (Pallas) and deterministic parameter init.
# ----------------------------------------------------------------------------
def attation_cov_forward(x, prepared, *, num_heads=NUM_HEADS,
                         compute_dtype=COMPUTE_DTYPE):
    B, S, E = x.shape
    assert E % num_heads == 0
    # MHA (batch_first=False) attends over axis 0 (B) with axis 1 (S) as its
    # batch: lay activations out as rows = (s, b).
    o = jnp.transpose(x, (1, 0, 2)).astype(jnp.float32).reshape(S * B, E)
    o = attention_stack(o, prepared["wqkv"], prepared["bqkv"],
                        prepared["wo"], prepared["bo"],
                        att_len=B, num_heads=num_heads,
                        compute_dtype=compute_dtype)
    # Relayout to rows = (b, s) for the Linear + circular Conv1d.
    # TODO(synk): fold this transpose into the conv kernel's BlockSpec.
    o = jnp.transpose(o.reshape(S, B, E), (1, 0, 2)).reshape(B * S, E)
    out = linear_circconv(o, prepared["wl3"], prepared["wc"],
                          prepared["bias_sm"], seq_len=S,
                          compute_dtype=compute_dtype)
    M = prepared["wl3"].shape[1] // 3
    return out.reshape(B, S, M)


def init_params(key, d_model, seq_len, inner_div, layer):
    scale = 0.1
    attn = []
    for _ in range(layer):
        k1, k2, k3, k4, key = jax.random.split(key, 5)
        attn.append((
            scale * jax.random.normal(k1, (3 * inner_div, inner_div), jnp.float32),
            scale * jax.random.normal(k2, (3 * inner_div,), jnp.float32),
            scale * jax.random.normal(k3, (inner_div, inner_div), jnp.float32),
            scale * jax.random.normal(k4, (inner_div,), jnp.float32),
        ))
    k1, k2, k3, k4, key = jax.random.split(key, 5)
    return {
        "attn": attn,
        "linear": (scale * jax.random.normal(k1, (d_model, inner_div), jnp.float32),
                   scale * jax.random.normal(k2, (d_model,), jnp.float32)),
        "conv": (scale * jax.random.normal(k3, (seq_len, seq_len, 3), jnp.float32),
                 scale * jax.random.normal(k4, (seq_len,), jnp.float32)),
    }


# Pure-JAX reference (mirrors PyTorch eval semantics) used for validation.
def reference_forward(x, params, num_heads=NUM_HEADS):
    o = x                                   # torch MHA view: (L=B, N=S, E)
    L, N, E = o.shape
    H = num_heads
    D = E // H
    for (w_in, b_in, w_out, b_out) in params["attn"]:
        wq, wk, wv = w_in[:E], w_in[E:2 * E], w_in[2 * E:]
        bq, bk, bv = b_in[:E], b_in[E:2 * E], b_in[2 * E:]
        q = o @ wq.T + bq
        k = o @ wk.T + bk
        v = o @ wv.T + bv
        qh = q.reshape(L, N, H, D)
        kh = k.reshape(L, N, H, D)
        vh = v.reshape(L, N, H, D)
        s = jnp.einsum("lnhd,mnhd->nhlm", qh, kh) / math.sqrt(D)
        p = jax.nn.softmax(s, axis=-1)
        att = jnp.einsum("nhlm,mnhd->lnhd", p, vh).reshape(L, N, E)
        o = att @ w_out.T + b_out + o
    wl, bl = params["linear"]
    wc, bc = params["conv"]
    y = o @ wl.T + bl                                   # (B, S, M)
    y_prev = jnp.roll(y, 1, axis=-1)
    y_next = jnp.roll(y, -1, axis=-1)
    out = (jnp.einsum("ts,bsm->btm", wc[:, :, 0], y_prev)
           + jnp.einsum("ts,bsm->btm", wc[:, :, 1], y)
           + jnp.einsum("ts,bsm->btm", wc[:, :, 2], y_next)
           + bc[None, :, None])
    return out


if __name__ == "__main__":
    B, SEQ_LEN, INNER_DIV, D_MODEL = 2, 8, 32, 16   # head_dim = 32 / 8 = 4
    key = jax.random.PRNGKey(0)
    kx, kp = jax.random.split(key)
    x = jax.random.normal(kx, (B, SEQ_LEN, INNER_DIV), jnp.float32)
    params = init_params(kp, d_model=D_MODEL, seq_len=SEQ_LEN,
                         inner_div=INNER_DIV, layer=2)
    prepared = prepare_params(params)        # one-time weight preprocessing

    out = jax.block_until_ready(jax.jit(attation_cov_forward)(x, prepared))
    ref = jax.block_until_ready(reference_forward(x, params))

    assert out.shape == (B, SEQ_LEN, D_MODEL), out.shape
    np.testing.assert_allclose(np.asarray(out), np.asarray(ref),
                               atol=1e-2, rtol=1e-2)
    print("KERNEL_OK")
</pallas_src>

<mosaic_0001>
module attributes {stable_mosaic.version = 11 : i64} {
  func.func @_linear_circconv_kernel(%arg0: i32, %arg1: memref<8x32xf32, #tpu.memory_space<vmem>>, %arg2: memref<32x48xf32, #tpu.memory_space<vmem>>, %arg3: memref<3x8x8xf32, #tpu.memory_space<vmem>>, %arg4: memref<8x16xf32, #tpu.memory_space<vmem>>, %arg5: memref<8x16xf32, #tpu.memory_space<vmem>>) attributes {dimension_semantics = [#tpu.dimension_semantics<parallel>], iteration_bounds = array<i64: 2>, scalar_prefetch = 0 : i64, scratch_operands = 0 : i64, tpu.core_type = #tpu.core_type<tc>, window_params = [{transform_indices = @transform_0, window_bounds = array<i64: 8, 32>}, {pipeline_mode = #tpu.pipeline_mode<synchronous>, transform_indices = @transform_1, window_bounds = array<i64: 32, 48>}, {pipeline_mode = #tpu.pipeline_mode<synchronous>, transform_indices = @transform_2, window_bounds = array<i64: 3, 8, 8>}, {pipeline_mode = #tpu.pipeline_mode<synchronous>, transform_indices = @transform_3, window_bounds = array<i64: 8, 16>}, {transform_indices = @transform_4, window_bounds = array<i64: 8, 16>}]} {
    %c0 = arith.constant 0 : index
    %c0_0 = arith.constant 0 : index
    %0 = vector.load %arg1[%c0, %c0_0] : memref<8x32xf32, #tpu.memory_space<vmem>>, vector<8x32xf32>
    %c0_1 = arith.constant 0 : index
    %c0_2 = arith.constant 0 : index
    %1 = vector.load %arg2[%c0_1, %c0_2] : memref<32x48xf32, #tpu.memory_space<vmem>>, vector<32x48xf32>
    %cst = arith.constant dense<0.000000e+00> : vector<8x48xf32>
    %2 = tpu.matmul %0, %1, %cst {dimension_numbers = #tpu.dot_dimension_numbers<[1], [0], [0], [1], [0, 0, 1, 1], [], []>} : vector<8x32xf32>, vector<32x48xf32>, vector<8x48xf32> -> vector<8x48xf32>
    %c0_3 = arith.constant 0 : index
    %c0_4 = arith.constant 0 : index
    %c0_5 = arith.constant 0 : index
    %3 = vector.load %arg3[%c0_3, %c0_4, %c0_5] : memref<3x8x8xf32, #tpu.memory_space<vmem>>, vector<1x8x8xf32>
    %4 = vector.shape_cast %3 : vector<1x8x8xf32> to vector<8x8xf32>
    %c1 = arith.constant 1 : index
    %c0_6 = arith.constant 0 : index
    %c0_7 = arith.constant 0 : index
    %5 = vector.load %arg3[%c1, %c0_6, %c0_7] : memref<3x8x8xf32, #tpu.memory_space<vmem>>, vector<1x8x8xf32>
    %6 = vector.shape_cast %5 : vector<1x8x8xf32> to vector<8x8xf32>
    %c2 = arith.constant 2 : index
    %c0_8 = arith.constant 0 : index
    %c0_9 = arith.constant 0 : index
    %7 = vector.load %arg3[%c2, %c0_8, %c0_9] : memref<3x8x8xf32, #tpu.memory_space<vmem>>, vector<1x8x8xf32>
    %8 = vector.shape_cast %7 : vector<1x8x8xf32> to vector<8x8xf32>
    %c0_10 = arith.constant 0 : index
    %c0_11 = arith.constant 0 : index
    %9 = vector.load %arg4[%c0_10, %c0_11] : memref<8x16xf32, #tpu.memory_space<vmem>>, vector<8x16xf32>
    %10 = vector.extract_strided_slice %2 {offsets = [0, 0], sizes = [8, 16], strides = [1, 1]} : vector<8x48xf32> to vector<8x16xf32>
    %cst_12 = arith.constant dense<0.000000e+00> : vector<8x16xf32>
    %11 = tpu.matmul %4, %10, %cst_12 {dimension_numbers = #tpu.dot_dimension_numbers<[1], [0], [0], [1], [0, 0, 1, 1], [], []>} : vector<8x8xf32>, vector<8x16xf32>, vector<8x16xf32> -> vector<8x16xf32>
    %12 = vector.extract_strided_slice %2 {offsets = [0, 16], sizes = [8, 16], strides = [1, 1]} : vector<8x48xf32> to vector<8x16xf32>
    %cst_13 = arith.constant dense<0.000000e+00> : vector<8x16xf32>
    %13 = tpu.matmul %6, %12, %cst_13 {dimension_numbers = #tpu.dot_dimension_numbers<[1], [0], [0], [1], [0, 0, 1, 1], [], []>} : vector<8x8xf32>, vector<8x16xf32>, vector<8x16xf32> -> vector<8x16xf32>
    %14 = arith.addf %11, %13 : vector<8x16xf32>
    %15 = vector.extract_strided_slice %2 {offsets = [0, 32], sizes = [8, 16], strides = [1, 1]} : vector<8x48xf32> to vector<8x16xf32>
    %cst_14 = arith.constant dense<0.000000e+00> : vector<8x16xf32>
    %16 = tpu.matmul %8, %15, %cst_14 {dimension_numbers = #tpu.dot_dimension_numbers<[1], [0], [0], [1], [0, 0, 1, 1], [], []>} : vector<8x8xf32>, vector<8x16xf32>, vector<8x16xf32> -> vector<8x16xf32>
    %17 = arith.addf %14, %16 : vector<8x16xf32>
    %18 = arith.addf %17, %9 : vector<8x16xf32>
    %c0_15 = arith.constant 0 : index
    %c0_16 = arith.constant 0 : index
    %19 = vector.load %arg5[%c0_15, %c0_16] : memref<8x16xf32, #tpu.memory_space<vmem>>, vector<8x16xf32>
    tpu.vector_store %arg5[%c0_15, %c0_16], %18 {strides = array<i32>} : memref<8x16xf32, #tpu.memory_space<vmem>>, vector<8x16xf32>,
    return
  }
  func.func @transform_0(%arg0: i32) -> (i32, i32) {
    %c0_i32 = arith.constant 0 : i32
    %c0_i32_0 = arith.constant 0 : i32
    return %arg0, %c0_i32 : i32, i32
  }
  func.func @transform_1(%arg0: i32) -> (i32, i32) {
    %c0_i32 = arith.constant 0 : i32
    %c0_i32_0 = arith.constant 0 : i32
    %c0_i32_1 = arith.constant 0 : i32
    return %c0_i32, %c0_i32_0 : i32, i32
  }
  func.func @transform_2(%arg0: i32) -> (i32, i32, i32) {
    %c0_i32 = arith.constant 0 : i32
    %c0_i32_0 = arith.constant 0 : i32
    %c0_i32_1 = arith.constant 0 : i32
    %c0_i32_2 = arith.constant 0 : i32
    return %c0_i32, %c0_i32_0, %c0_i32_1 : i32, i32, i32
  }
  func.func @transform_3(%arg0: i32) -> (i32, i32) {
    %c0_i32 = arith.constant 0 : i32
    %c0_i32_0 = arith.constant 0 : i32
    %c0_i32_1 = arith.constant 0 : i32
    return %c0_i32, %c0_i32_0 : i32, i32
  }
  func.func @transform_4(%arg0: i32) -> (i32, i32) {
    %c0_i32 = arith.constant 0 : i32
    %c0_i32_0 = arith.constant 0 : i32
    return %arg0, %c0_i32 : i32, i32
  }
}

module attributes {stable_mosaic.version = 11 : i64} {
  func.func @_attn_stack_kernel(%arg0: i32, %arg1: memref<8x32xf32, #tpu.memory_space<vmem>>, %arg2: memref<8x8xf32, #tpu.memory_space<vmem>>, %arg3: memref<2x32x96xf32, #tpu.memory_space<vmem>>, %arg4: memref<2x1x96xf32, #tpu.memory_space<vmem>>, %arg5: memref<2x32x32xf32, #tpu.memory_space<vmem>>, %arg6: memref<2x1x32xf32, #tpu.memory_space<vmem>>, %arg7: memref<8x32xf32, #tpu.memory_space<vmem>>) attributes {dimension_semantics = [#tpu.dimension_semantics<parallel>], iteration_bounds = array<i64: 2>, scalar_prefetch = 0 : i64, scratch_operands = 0 : i64, tpu.core_type = #tpu.core_type<tc>, window_params = [{transform_indices = @transform_0, window_bounds = array<i64: 8, 32>}, {pipeline_mode = #tpu.pipeline_mode<synchronous>, transform_indices = @transform_1, window_bounds = array<i64: 8, 8>}, {pipeline_mode = #tpu.pipeline_mode<synchronous>, transform_indices = @transform_2, window_bounds = array<i64: 2, 32, 96>}, {pipeline_mode = #tpu.pipeline_mode<synchronous>, transform_indices = @transform_3, window_bounds = array<i64: 2, 1, 96>}, {pipeline_mode = #tpu.pipeline_mode<synchronous>, transform_indices = @transform_4, window_bounds = array<i64: 2, 32, 32>}, {pipeline_mode = #tpu.pipeline_mode<synchronous>, transform_indices = @transform_5, window_bounds = array<i64: 2, 1, 32>}, {transform_indices = @transform_6, window_bounds = array<i64: 8, 32>}]} {
    %c0 = arith.constant 0 : index
    %c0_0 = arith.constant 0 : index
    %0 = vector.load %arg2[%c0, %c0_0] : memref<8x8xf32, #tpu.memory_space<vmem>>, vector<8x8xf32>
    %c0_1 = arith.constant 0 : index
    %c0_2 = arith.constant 0 : index
    %1 = vector.load %arg1[%c0_1, %c0_2] : memref<8x32xf32, #tpu.memory_space<vmem>>, vector<8x32xf32>
    %c0_3 = arith.constant 0 : index
    %c0_4 = arith.constant 0 : index
    %c0_5 = arith.constant 0 : index
    %2 = vector.load %arg3[%c0_3, %c0_4, %c0_5] : memref<2x32x96xf32, #tpu.memory_space<vmem>>, vector<1x32x96xf32>
    %3 = vector.shape_cast %2 : vector<1x32x96xf32> to vector<32x96xf32>
    %c0_6 = arith.constant 0 : index
    %c0_7 = arith.constant 0 : index
    %c0_8 = arith.constant 0 : index
    %4 = vector.load %arg4[%c0_6, %c0_7, %c0_8] : memref<2x1x96xf32, #tpu.memory_space<vmem>>, vector<1x1x96xf32>
    %5 = vector.shape_cast %4 : vector<1x1x96xf32> to vector<1x96xf32>
    %c0_9 = arith.constant 0 : index
    %c0_10 = arith.constant 0 : index
    %c0_11 = arith.constant 0 : index
    %6 = vector.load %arg5[%c0_9, %c0_10, %c0_11] : memref<2x32x32xf32, #tpu.memory_space<vmem>>, vector<1x32x32xf32>
    %7 = vector.shape_cast %6 : vector<1x32x32xf32> to vector<32x32xf32>
    %c0_12 = arith.constant 0 : index
    %c0_13 = arith.constant 0 : index
    %c0_14 = arith.constant 0 : index
    %8 = vector.load %arg6[%c0_12, %c0_13, %c0_14] : memref<2x1x32xf32, #tpu.memory_space<vmem>>, vector<1x1x32xf32>
    %9 = vector.shape_cast %8 : vector<1x1x32xf32> to vector<1x32xf32>
    %cst = arith.constant dense<0.000000e+00> : vector<8x96xf32>
    %10 = tpu.matmul %1, %3, %cst {dimension_numbers = #tpu.dot_dimension_numbers<[1], [0], [0], [1], [0, 0, 1, 1], [], []>} : vector<8x32xf32>, vector<32x96xf32>, vector<8x96xf32> -> vector<8x96xf32>
    %11 = vector.broadcast %5 : vector<1x96xf32> to vector<8x96xf32>
    %12 = arith.addf %10, %11 : vector<8x96xf32>
    %13 = vector.extract_strided_slice %12 {offsets = [0, 0], sizes = [8, 4], strides = [1, 1]} : vector<8x96xf32> to vector<8x4xf32>
    %14 = vector.extract_strided_slice %12 {offsets = [0, 32], sizes = [8, 4], strides = [1, 1]} : vector<8x96xf32> to vector<8x4xf32>
    %15 = vector.extract_strided_slice %12 {offsets = [0, 64], sizes = [8, 4], strides = [1, 1]} : vector<8x96xf32> to vector<8x4xf32>
    "tpu.trace_start"() <{level = 10 : i32, message = "md,nd->mn"}> : () -> ()
    %cst_15 = arith.constant dense<0.000000e+00> : vector<8x8xf32>
    %16 = tpu.matmul %13, %14, %cst_15 {dimension_numbers = #tpu.dot_dimension_numbers<[1], [1], [0], [0], [0, 0, 1, 0], [], []>} : vector<8x4xf32>, vector<8x4xf32>, vector<8x8xf32> -> vector<8x8xf32>
    "tpu.trace_stop"() : () -> ()
    %cst_16 = arith.constant 5.000000e-01 : f32
    %17 = vector.broadcast %cst_16 : f32 to vector<8x8xf32>
    %18 = arith.mulf %16, %17 : vector<8x8xf32>
    %19 = arith.addf %18, %0 : vector<8x8xf32>
    %cst_17 = arith.constant dense<0xFF800000> : vector<8xf32>
    %20 = vector.multi_reduction <maximumf>, %19, %cst_17 [1] : vector<8x8xf32> to vector<8xf32>
    %21 = vector.shape_cast %20 : vector<8xf32> to vector<8x1xf32>
    %22 = vector.broadcast %21 : vector<8x1xf32> to vector<8x8xf32>
    %23 = arith.subf %19, %22 : vector<8x8xf32>
    %24 = math.exp %23 : vector<8x8xf32>
    %cst_18 = arith.constant dense<0.000000e+00> : vector<8xf32>
    %25 = vector.multi_reduction <add>, %24, %cst_18 [1] : vector<8x8xf32> to vector<8xf32>
    %26 = vector.shape_cast %25 : vector<8xf32> to vector<8x1xf32>
    %27 = tpu.reciprocal %26 {approx = true} : vector<8x1xf32> -> vector<8x1xf32>
    %28 = vector.broadcast %27 : vector<8x1xf32> to vector<8x8xf32>
    %29 = arith.mulf %24, %28 : vector<8x8xf32>
    %cst_19 = arith.constant dense<0.000000e+00> : vector<8x4xf32>
    %30 = tpu.matmul %29, %15, %cst_19 {dimension_numbers = #tpu.dot_dimension_numbers<[1], [0], [0], [1], [0, 0, 1, 1], [], []>} : vector<8x8xf32>, vector<8x4xf32>, vector<8x4xf32> -> vector<8x4xf32>
    %31 = vector.extract_strided_slice %12 {offsets = [0, 4], sizes = [8, 4], strides = [1, 1]} : vector<8x96xf32> to vector<8x4xf32>
    %32 = vector.extract_strided_slice %12 {offsets = [0, 36], sizes = [8, 4], strides = [1, 1]} : vector<8x96xf32> to vector<8x4xf32>
    %33 = vector.extract_strided_slice %12 {offsets = [0, 68], sizes = [8, 4], strides = [1, 1]} : vector<8x96xf32> to vector<8x4xf32>
    "tpu.trace_start"() <{level = 10 : i32, message = "md,nd->mn"}> : () -> ()
    %cst_20 = arith.constant dense<0.000000e+00> : vector<8x8xf32>
    %34 = tpu.matmul %31, %32, %cst_20 {dimension_numbers = #tpu.dot_dimension_numbers<[1], [1], [0], [0], [0, 0, 1, 0], [], []>} : vector<8x4xf32>, vector<8x4xf32>, vector<8x8xf32> -> vector<8x8xf32>
    "tpu.trace_stop"() : () -> ()
    %cst_21 = arith.constant 5.000000e-01 : f32
    %35 = vector.broadcast %cst_21 : f32 to vector<8x8xf32>
    %36 = arith.mulf %34, %35 : vector<8x8xf32>
    %37 = arith.addf %36, %0 : vector<8x8xf32>
    %cst_22 = arith.constant dense<0xFF800000> : vector<8xf32>
    %38 = vector.multi_reduction <maximumf>, %37, %cst_22 [1] : vector<8x8xf32> to vector<8xf32>
    %39 = vector.shape_cast %38 : vector<8xf32> to vector<8x1xf32>
    %40 = vector.broadcast %39 : vector<8x1xf32> to vector<8x8xf32>
    %41 = arith.subf %37, %40 : vector<8x8xf32>
    %42 = math.exp %41 : vector<8x8xf32>
    %cst_23 = arith.constant dense<0.000000e+00> : vector<8xf32>
    %43 = vector.multi_reduction <add>, %42, %cst_23 [1] : vector<8x8xf32> to vector<8xf32>
    %44 = vector.shape_cast %43 : vector<8xf32> to vector<8x1xf32>
    %45 = tpu.reciprocal %44 {approx = true} : vector<8x1xf32> -> vector<8x1xf32>
    %46 = vector.broadcast %45 : vector<8x1xf32> to vector<8x8xf32>
    %47 = arith.mulf %42, %46 : vector<8x8xf32>
    %cst_24 = arith.constant dense<0.000000e+00> : vector<8x4xf32>
    %48 = tpu.matmul %47, %33, %cst_24 {dimension_numbers = #tpu.dot_dimension_numbers<[1], [0], [0], [1], [0, 0, 1, 1], [], []>} : vector<8x8xf32>, vector<8x4xf32>, vector<8x4xf32> -> vector<8x4xf32>
    %49 = vector.extract_strided_slice %12 {offsets = [0, 8], sizes = [8, 4], strides = [1, 1]} : vector<8x96xf32> to vector<8x4xf32>
    %50 = vector.extract_strided_slice %12 {offsets = [0, 40], sizes = [8, 4], strides = [1, 1]} : vector<8x96xf32> to vector<8x4xf32>
    %51 = vector.extract_strided_slice %12 {offsets = [0, 72], sizes = [8, 4], strides = [1, 1]} : vector<8x96xf32> to vector<8x4xf32>
    "tpu.trace_start"() <{level = 10 : i32, message = "md,nd->mn"}> : () -> ()
    %cst_25 = arith.constant dense<0.000000e+00> : vector<8x8xf32>
    %52 = tpu.matmul %49, %50, %cst_25 {dimension_numbers = #tpu.dot_dimension_numbers<[1], [1], [0], [0], [0, 0, 1, 0], [], []>} : vector<8x4xf32>, vector<8x4xf32>, vector<8x8xf32> -> vector<8x8xf32>
    "tpu.trace_stop"() : () -> ()
    %cst_26 = arith.constant 5.000000e-01 : f32
    %53 = vector.broadcast %cst_26 : f32 to vector<8x8xf32>
    %54 = arith.mulf %52, %53 : vector<8x8xf32>
    %55 = arith.addf %54, %0 : vector<8x8xf32>
    %cst_27 = arith.constant dense<0xFF800000> : vector<8xf32>
    %56 = vector.multi_reduction <maximumf>, %55, %cst_27 [1] : vector<8x8xf32> to vector<8xf32>
    %57 = vector.shape_cast %56 : vector<8xf32> to vector<8x1xf32>
    %58 = vector.broadcast %57 : vector<8x1xf32> to vector<8x8xf32>
    %59 = arith.subf %55, %58 : vector<8x8xf32>
    %60 = math.exp %59 : vector<8x8xf32>
    %cst_28 = arith.constant dense<0.000000e+00> : vector<8xf32>
    %61 = vector.multi_reduction <add>, %60, %cst_28 [1] : vector<8x8xf32> to vector<8xf32>
    %62 = vector.shape_cast %61 : vector<8xf32> to vector<8x1xf32>
    %63 = tpu.reciprocal %62 {approx = true} : vector<8x1xf32> -> vector<8x1xf32>
    %64 = vector.broadcast %63 : vector<8x1xf32> to vector<8x8xf32>
    %65 = arith.mulf %60, %64 : vector<8x8xf32>
    %cst_29 = arith.constant dense<0.000000e+00> : vector<8x4xf32>
    %66 = tpu.matmul %65, %51, %cst_29 {dimension_numbers = #tpu.dot_dimension_numbers<[1], [0], [0], [1], [0, 0, 1, 1], [], []>} : vector<8x8xf32>, vector<8x4xf32>, vector<8x4xf32> -> vector<8x4xf32>
    %67 = vector.extract_strided_slice %12 {offsets = [0, 12], sizes = [8, 4], strides = [1, 1]} : vector<8x96xf32> to vector<8x4xf32>
    %68 = vector.extract_strided_slice %12 {offsets = [0, 44], sizes = [8, 4], strides = [1, 1]} : vector<8x96xf32> to vector<8x4xf32>
    %69 = vector.extract_strided_slice %12 {offsets = [0, 76], sizes = [8, 4], strides = [1, 1]} : vector<8x96xf32> to vector<8x4xf32>
    "tpu.trace_start"() <{level = 10 : i32, message = "md,nd->mn"}> : () -> ()
    %cst_30 = arith.constant dense<0.000000e+00> : vector<8x8xf32>
    %70 = tpu.matmul %67, %68, %cst_30 {dimension_numbers = #tpu.dot_dimension_numbers<[1], [1], [0], [0], [0, 0, 1, 0], [], []>} : vector<8x4xf32>, vector<8x4xf32>, vector<8x8xf32> -> vector<8x8xf32>
    "tpu.trace_stop"() : () -> ()
    %cst_31 = arith.constant 5.000000e-01 : f32
    %71 = vector.broadcast %cst_31 : f32 to vector<8x8xf32>
    %72 = arith.mulf %70, %71 : vector<8x8xf32>
    %73 = arith.addf %72, %0 : vector<8x8xf32>
    %cst_32 = arith.constant dense<0xFF800000> : vector<8xf32>
    %74 = vector.multi_reduction <maximumf>, %73, %cst_32 [1] : vector<8x8xf32> to vector<8xf32>
    %75 = vector.shape_cast %74 : vector<8xf32> to vector<8x1xf32>
    %76 = vector.broadcast %75 : vector<8x1xf32> to vector<8x8xf32>
    %77 = arith.subf %73, %76 : vector<8x8xf32>
    %78 = math.exp %77 : vector<8x8xf32>
    %cst_33 = arith.constant dense<0.000000e+00> : vector<8xf32>
    %79 = vector.multi_reduction <add>, %78, %cst_33 [1] : vector<8x8xf32> to vector<8xf32>
    %80 = vector.shape_cast %79 : vector<8xf32> to vector<8x1xf32>
    %81 = tpu.reciprocal %80 {approx = true} : vector<8x1xf32> -> vector<8x1xf32>
    %82 = vector.broadcast %81 : vector<8x1xf32> to vector<8x8xf32>
    %83 = arith.mulf %78, %82 : vector<8x8xf32>
    %cst_34 = arith.constant dense<0.000000e+00> : vector<8x4xf32>
    %84 = tpu.matmul %83, %69, %cst_34 {dimension_numbers = #tpu.dot_dimension_numbers<[1], [0], [0], [1], [0, 0, 1, 1], [], []>} : vector<8x8xf32>, vector<8x4xf32>, vector<8x4xf32> -> vector<8x4xf32>
    %85 = vector.extract_strided_slice %12 {offsets = [0, 16], sizes = [8, 4], strides = [1, 1]} : vector<8x96xf32> to vector<8x4xf32>
    %86 = vector.extract_strided_slice %12 {offsets = [0, 48], sizes = [8, 4], strides = [1, 1]} : vector<8x96xf32> to vector<8x4xf32>
    %87 = vector.extract_strided_slice %12 {offsets = [0, 80], sizes = [8, 4], strides = [1, 1]} : vector<8x96xf32> to vector<8x4xf32>
    "tpu.trace_start"() <{level = 10 : i32, message = "md,nd->mn"}> : () -> ()
    %cst_35 = arith.constant dense<0.000000e+00> : vector<8x8xf32>
    %88 = tpu.matmul %85, %86, %cst_35 {dimension_numbers = #tpu.dot_dimension_numbers<[1], [1], [0], [0], [0, 0, 1, 0], [], []>} : vector<8x4xf32>, vector<8x4xf32>, vector<8x8xf32> -> vector<8x8xf32>
    "tpu.trace_stop"() : () -> ()
    %cst_36 = arith.constant 5.000000e-01 : f32
    %89 = vector.broadcast %cst_36 : f32 to vector<8x8xf32>
    %90 = arith.mulf %88, %89 : vector<8x8xf32>
    %91 = arith.addf %90, %0 : vector<8x8xf32>
    %cst_37 = arith.constant dense<0xFF800000> : vector<8xf32>
    %92 = vector.multi_reduction <maximumf>, %91, %cst_37 [1] : vector<8x8xf32> to vector<8xf32>
    %93 = vector.shape_cast %92 : vector<8xf32> to vector<8x1xf32>
    %94 = vector.broadcast %93 : vector<8x1xf32> to vector<8x8xf32>
    %95 = arith.subf %91, %94 : vector<8x8xf32>
    %96 = math.exp %95 : vector<8x8xf32>
    %cst_38 = arith.constant dense<0.000000e+00> : vector<8xf32>
    %97 = vector.multi_reduction <add>, %96, %cst_38 [1] : vector<8x8xf32> to vector<8xf32>
    %98 = vector.shape_cast %97 : vector<8xf32> to vector<8x1xf32>
    %99 = tpu.reciprocal %98 {approx = true} : vector<8x1xf32> -> vector<8x1xf32>
    %100 = vector.broadcast %99 : vector<8x1xf32> to vector<8x8xf32>
    %101 = arith.mulf %96, %100 : vector<8x8xf32>
    %cst_39 = arith.constant dense<0.000000e+00> : vector<8x4xf32>
    %102 = tpu.matmul %101, %87, %cst_39 {dimension_numbers = #tpu.dot_dimension_numbers<[1], [0], [0], [1], [0, 0, 1, 1], [], []>} : vector<8x8xf32>, vector<8x4xf32>, vector<8x4xf32> -> vector<8x4xf32>
    %103 = vector.extract_strided_slice %12 {offsets = [0, 20], sizes = [8, 4], strides = [1, 1]} : vector<8x96xf32> to vector<8x4xf32>
    %104 = vector.extract_strided_slice %12 {offsets = [0, 52], sizes = [8, 4], strides = [1, 1]} : vector<8x96xf32> to vector<8x4xf32>
    %105 = vector.extract_strided_slice %12 {offsets = [0, 84], sizes = [8, 4], strides = [1, 1]} : vector<8x96xf32> to vector<8x4xf32>
    "tpu.trace_start"() <{level = 10 : i32, message = "md,nd->mn"}> : () -> ()
    %cst_40 = arith.constant dense<0.000000e+00> : vector<8x8xf32>
    %106 = tpu.matmul %103, %104, %cst_40 {dimension_numbers = #tpu.dot_dimension_numbers<[1], [1], [0], [0], [0, 0, 1, 0], [], []>} : vector<8x4xf32>, vector<8x4xf32>, vector<8x8xf32> -> vector<8x8xf32>
    "tpu.trace_stop"() : () -> ()
    %cst_41 = arith.constant 5.000000e-01 : f32
    %107 = vector.broadcast %cst_41 : f32 to vector<8x8xf32>
    %108 = arith.mulf %106, %107 : vector<8x8xf32>
    %109 = arith.addf %108, %0 : vector<8x8xf32>
    %cst_42 = arith.constant dense<0xFF800000> : vector<8xf32>
    %110 = vector.multi_reduction <maximumf>, %109, %cst_42 [1] : vector<8x8xf32> to vector<8xf32>
    %111 = vector.shape_cast %110 : vector<8xf32> to vector<8x1xf32>
    %112 = vector.broadcast %111 : vector<8x1xf32> to vector<8x8xf32>
    %113 = arith.subf %109, %112 : vector<8x8xf32>
    %114 = math.exp %113 : vector<8x8xf32>
    %cst_43 = arith.constant dense<0.000000e+00> : vector<8xf32>
    %115 = vector.multi_reduction <add>, %114, %cst_43 [1] : vector<8x8xf32> to vector<8xf32>
    %116 = vector.shape_cast %115 : vector<8xf32> to vector<8x1xf32>
    %117 = tpu.reciprocal %116 {approx = true} : vector<8x1xf32> -> vector<8x1xf32>
    %118 = vector.broadcast %117 : vector<8x1xf32> to vector<8x8xf32>
    %119 = arith.mulf %114, %118 : vector<8x8xf32>
    %cst_44 = arith.constant dense<0.000000e+00> : vector<8x4xf32>
    %120 = tpu.matmul %119, %105, %cst_44 {dimension_numbers = #tpu.dot_dimension_numbers<[1], [0], [0], [1], [0, 0, 1, 1], [], []>} : vector<8x8xf32>, vector<8x4xf32>, vector<8x4xf32> -> vector<8x4xf32>
    %121 = vector.extract_strided_slice %12 {offsets = [0, 24], sizes = [8, 4], strides = [1, 1]} : vector<8x96xf32> to vector<8x4xf32>
    %122 = vector.extract_strided_slice %12 {offsets = [0, 56], sizes = [8, 4], strides = [1, 1]} : vector<8x96xf32> to vector<8x4xf32>
    %123 = vector.extract_strided_slice %12 {offsets = [0, 88], sizes = [8, 4], strides = [1, 1]} : vector<8x96xf32> to vector<8x4xf32>
    "tpu.trace_start"() <{level = 10 : i32, message = "md,nd->mn"}> : () -> ()
    %cst_45 = arith.constant dense<0.000000e+00> : vector<8x8xf32>
    %124 = tpu.matmul %121, %122, %cst_45 {dimension_numbers = #tpu.dot_dimension_numbers<[1], [1], [0], [0], [0, 0, 1, 0], [], []>} : vector<8x4xf32>, vector<8x4xf32>, vector<8x8xf32> -> vector<8x8xf32>
    "tpu.trace_stop"() : () -> ()
    %cst_46 = arith.constant 5.000000e-01 : f32
    %125 = vector.broadcast %cst_46 : f32 to vector<8x8xf32>
    %126 = arith.mulf %124, %125 : vector<8x8xf32>
    %127 = arith.addf %126, %0 : vector<8x8xf32>
    %cst_47 = arith.constant dense<0xFF800000> : vector<8xf32>
    %128 = vector.multi_reduction <maximumf>, %127, %cst_47 [1] : vector<8x8xf32> to vector<8xf32>
    %129 = vector.shape_cast %128 : vector<8xf32> to vector<8x1xf32>
    %130 = vector.broadcast %129 : vector<8x1xf32> to vector<8x8xf32>
    %131 = arith.subf %127, %130 : vector<8x8xf32>
    %132 = math.exp %131 : vector<8x8xf32>
    %cst_48 = arith.constant dense<0.000000e+00> : vector<8xf32>
    %133 = vector.multi_reduction <add>, %132, %cst_48 [1] : vector<8x8xf32> to vector<8xf32>
    %134 = vector.shape_cast %133 : vector<8xf32> to vector<8x1xf32>
    %135 = tpu.reciprocal %134 {approx = true} : vector<8x1xf32> -> vector<8x1xf32>
    %136 = vector.broadcast %135 : vector<8x1xf32> to vector<8x8xf32>
    %137 = arith.mulf %132, %136 : vector<8x8xf32>
    %cst_49 = arith.constant dense<0.000000e+00> : vector<8x4xf32>
    %138 = tpu.matmul %137, %123, %cst_49 {dimension_numbers = #tpu.dot_dimension_numbers<[1], [0], [0], [1], [0, 0, 1, 1], [], []>} : vector<8x8xf32>, vector<8x4xf32>, vector<8x4xf32> -> vector<8x4xf32>
    %139 = vector.extract_strided_slice %12 {offsets = [0, 28], sizes = [8, 4], strides = [1, 1]} : vector<8x96xf32> to vector<8x4xf32>
    %140 = vector.extract_strided_slice %12 {offsets = [0, 60], sizes = [8, 4], strides = [1, 1]} : vector<8x96xf32> to vector<8x4xf32>
    %141 = vector.extract_strided_slice %12 {offsets = [0, 92], sizes = [8, 4], strides = [1, 1]} : vector<8x96xf32> to vector<8x4xf32>
    "tpu.trace_start"() <{level = 10 : i32, message = "md,nd->mn"}> : () -> ()
    %cst_50 = arith.constant dense<0.000000e+00> : vector<8x8xf32>
    %142 = tpu.matmul %139, %140, %cst_50 {dimension_numbers = #tpu.dot_dimension_numbers<[1], [1], [0], [0], [0, 0, 1, 0], [], []>} : vector<8x4xf32>, vector<8x4xf32>, vector<8x8xf32> -> vector<8x8xf32>
    "tpu.trace_stop"() : () -> ()
    %cst_51 = arith.constant 5.000000e-01 : f32
    %143 = vector.broadcast %cst_51 : f32 to vector<8x8xf32>
    %144 = arith.mulf %142, %143 : vector<8x8xf32>
    %145 = arith.addf %144, %0 : vector<8x8xf32>
    %cst_52 = arith.constant dense<0xFF800000> : vector<8xf32>
    %146 = vector.multi_reduction <maximumf>, %145, %cst_52 [1] : vector<8x8xf32> to vector<8xf32>
    %147 = vector.shape_cast %146 : vector<8xf32> to vector<8x1xf32>
    %148 = vector.broadcast %147 : vector<8x1xf32> to vector<8x8xf32>
    %149 = arith.subf %145, %148 : vector<8x8xf32>
    %150 = math.exp %149 : vector<8x8xf32>
    %cst_53 = arith.constant dense<0.000000e+00> : vector<8xf32>
    %151 = vector.multi_reduction <add>, %150, %cst_53 [1] : vector<8x8xf32> to vector<8xf32>
    %152 = vector.shape_cast %151 : vector<8xf32> to vector<8x1xf32>
    %153 = tpu.reciprocal %152 {approx = true} : vector<8x1xf32> -> vector<8x1xf32>
    %154 = vector.broadcast %153 : vector<8x1xf32> to vector<8x8xf32>
    %155 = arith.mulf %150, %154 : vector<8x8xf32>
    %cst_54 = arith.constant dense<0.000000e+00> : vector<8x4xf32>
    %156 = tpu.matmul %155, %141, %cst_54 {dimension_numbers = #tpu.dot_dimension_numbers<[1], [0], [0], [1], [0, 0, 1, 1], [], []>} : vector<8x8xf32>, vector<8x4xf32>, vector<8x4xf32> -> vector<8x4xf32>
    %157 = tpu.concatenate %30, %48, %66, %84, %102, %120, %138, %156 in 1 : vector<8x4xf32>, vector<8x4xf32>, vector<8x4xf32>, vector<8x4xf32>, vector<8x4xf32>, vector<8x4xf32>, vector<8x4xf32>, vector<8x4xf32> -> vector<8x32xf32>
    %cst_55 = arith.constant dense<0.000000e+00> : vector<8x32xf32>
    %158 = tpu.matmul %157, %7, %cst_55 {dimension_numbers = #tpu.dot_dimension_numbers<[1], [0], [0], [1], [0, 0, 1, 1], [], []>} : vector<8x32xf32>, vector<32x32xf32>, vector<8x32xf32> -> vector<8x32xf32>
    %159 = vector.broadcast %9 : vector<1x32xf32> to vector<8x32xf32>
    %160 = arith.addf %158, %159 : vector<8x32xf32>
    %161 = arith.addf %160, %1 : vector<8x32xf32>
    %c1 = arith.constant 1 : index
    %c0_56 = arith.constant 0 : index
    %c0_57 = arith.constant 0 : index
    %162 = vector.load %arg3[%c1, %c0_56, %c0_57] : memref<2x32x96xf32, #tpu.memory_space<vmem>>, vector<1x32x96xf32>
    %163 = vector.shape_cast %162 : vector<1x32x96xf32> to vector<32x96xf32>
    %c1_58 = arith.constant 1 : index
    %c0_59 = arith.constant 0 : index
    %c0_60 = arith.constant 0 : index
    %164 = vector.load %arg4[%c1_58, %c0_59, %c0_60] : memref<2x1x96xf32, #tpu.memory_space<vmem>>, vector<1x1x96xf32>
    %165 = vector.shape_cast %164 : vector<1x1x96xf32> to vector<1x96xf32>
    %c1_61 = arith.constant 1 : index
    %c0_62 = arith.constant 0 : index
    %c0_63 = arith.constant 0 : index
    %166 = vector.load %arg5[%c1_61, %c0_62, %c0_63] : memref<2x32x32xf32, #tpu.memory_space<vmem>>, vector<1x32x32xf32>
    %167 = vector.shape_cast %166 : vector<1x32x32xf32> to vector<32x32xf32>
    %c1_64 = arith.constant 1 : index
    %c0_65 = arith.constant 0 : index
    %c0_66 = arith.constant 0 : index
    %168 = vector.load %arg6[%c1_64, %c0_65, %c0_66] : memref<2x1x32xf32, #tpu.memory_space<vmem>>, vector<1x1x32xf32>
    %169 = vector.shape_cast %168 : vector<1x1x32xf32> to vector<1x32xf32>
    %cst_67 = arith.constant dense<0.000000e+00> : vector<8x96xf32>
    %170 = tpu.matmul %161, %163, %cst_67 {dimension_numbers = #tpu.dot_dimension_numbers<[1], [0], [0], [1], [0, 0, 1, 1], [], []>} : vector<8x32xf32>, vector<32x96xf32>, vector<8x96xf32> -> vector<8x96xf32>
    %171 = vector.broadcast %165 : vector<1x96xf32> to vector<8x96xf32>
    %172 = arith.addf %170, %171 : vector<8x96xf32>
    %173 = vector.extract_strided_slice %172 {offsets = [0, 0], sizes = [8, 4], strides = [1, 1]} : vector<8x96xf32> to vector<8x4xf32>
    %174 = vector.extract_strided_slice %172 {offsets = [0, 32], sizes = [8, 4], strides = [1, 1]} : vector<8x96xf32> to vector<8x4xf32>
    %175 = vector.extract_strided_slice %172 {offsets = [0, 64], sizes = [8, 4], strides = [1, 1]} : vector<8x96xf32> to vector<8x4xf32>
    "tpu.trace_start"() <{level = 10 : i32, message = "md,nd->mn"}> : () -> ()
    %cst_68 = arith.constant dense<0.000000e+00> : vector<8x8xf32>
    %176 = tpu.matmul %173, %174, %cst_68 {dimension_numbers = #tpu.dot_dimension_numbers<[1], [1], [0], [0], [0, 0, 1, 0], [], []>} : vector<8x4xf32>, vector<8x4xf32>, vector<8x8xf32> -> vector<8x8xf32>
    "tpu.trace_stop"() : () -> ()
    %cst_69 = arith.constant 5.000000e-01 : f32
    %177 = vector.broadcast %cst_69 : f32 to vector<8x8xf32>
    %178 = arith.mulf %176, %177 : vector<8x8xf32>
    %179 = arith.addf %178, %0 : vector<8x8xf32>
    %cst_70 = arith.constant dense<0xFF800000> : vector<8xf32>
    %180 = vector.multi_reduction <maximumf>, %179, %cst_70 [1] : vector<8x8xf32> to vector<8xf32>
    %181 = vector.shape_cast %180 : vector<8xf32> to vector<8x1xf32>
    %182 = vector.broadcast %181 : vector<8x1xf32> to vector<8x8xf32>
    %183 = arith.subf %179, %182 : vector<8x8xf32>
    %184 = math.exp %183 : vector<8x8xf32>
    %cst_71 = arith.constant dense<0.000000e+00> : vector<8xf32>
    %185 = vector.multi_reduction <add>, %184, %cst_71 [1] : vector<8x8xf32> to vector<8xf32>
    %186 = vector.shape_cast %185 : vector<8xf32> to vector<8x1xf32>
    %187 = tpu.reciprocal %186 {approx = true} : vector<8x1xf32> -> vector<8x1xf32>
    %188 = vector.broadcast %187 : vector<8x1xf32> to vector<8x8xf32>
    %189 = arith.mulf %184, %188 : vector<8x8xf32>
    %cst_72 = arith.constant dense<0.000000e+00> : vector<8x4xf32>
    %190 = tpu.matmul %189, %175, %cst_72 {dimension_numbers = #tpu.dot_dimension_numbers<[1], [0], [0], [1], [0, 0, 1, 1], [], []>} : vector<8x8xf32>, vector<8x4xf32>, vector<8x4xf32> -> vector<8x4xf32>
    %191 = vector.extract_strided_slice %172 {offsets = [0, 4], sizes = [8, 4], strides = [1, 1]} : vector<8x96xf32> to vector<8x4xf32>
    %192 = vector.extract_strided_slice %172 {offsets = [0, 36], sizes = [8, 4], strides = [1, 1]} : vector<8x96xf32> to vector<8x4xf32>
    %193 = vector.extract_strided_slice %172 {offsets = [0, 68], sizes = [8, 4], strides = [1, 1]} : vector<8x96xf32> to vector<8x4xf32>
    "tpu.trace_start"() <{level = 10 : i32, message = "md,nd->mn"}> : () -> ()
    %cst_73 = arith.constant dense<0.000000e+00> : vector<8x8xf32>
    %194 = tpu.matmul %191, %192, %cst_73 {dimension_numbers = #tpu.dot_dimension_numbers<[1], [1], [0], [0], [0, 0, 1, 0], [], []>} : vector<8x4xf32>, vector<8x4xf32>, vector<8x8xf32> -> vector<8x8xf32>
    "tpu.trace_stop"() : () -> ()
    %cst_74 = arith.constant 5.000000e-01 : f32
    %195 = vector.broadcast %cst_74 : f32 to vector<8x8xf32>
    %196 = arith.mulf %194, %195 : vector<8x8xf32>
    %197 = arith.addf %196, %0 : vector<8x8xf32>
    %cst_75 = arith.constant dense<0xFF800000> : vector<8xf32>
    %198 = vector.multi_reduction <maximumf>, %197, %cst_75 [1] : vector<8x8xf32> to vector<8xf32>
    %199 = vector.shape_cast %198 : vector<8xf32> to vector<8x1xf32>
    %200 = vector.broadcast %199 : vector<8x1xf32> to vector<8x8xf32>
    %201 = arith.subf %197, %200 : vector<8x8xf32>
    %202 = math.exp %201 : vector<8x8xf32>
    %cst_76 = arith.constant dense<0.000000e+00> : vector<8xf32>
    %203 = vector.multi_reduction <add>, %202, %cst_76 [1] : vector<8x8xf32> to vector<8xf32>
    %204 = vector.shape_cast %203 : vector<8xf32> to vector<8x1xf32>
    %205 = tpu.reciprocal %204 {approx = true} : vector<8x1xf32> -> vector<8x1xf32>
    %206 = vector.broadcast %205 : vector<8x1xf32> to vector<8x8xf32>
    %207 = arith.mulf %202, %206 : vector<8x8xf32>
    %cst_77 = arith.constant dense<0.000000e+00> : vector<8x4xf32>
    %208 = tpu.matmul %207, %193, %cst_77 {dimension_numbers = #tpu.dot_dimension_numbers<[1], [0], [0], [1], [0, 0, 1, 1], [], []>} : vector<8x8xf32>, vector<8x4xf32>, vector<8x4xf32> -> vector<8x4xf32>
    %209 = vector.extract_strided_slice %172 {offsets = [0, 8], sizes = [8, 4], strides = [1, 1]} : vector<8x96xf32> to vector<8x4xf32>
    %210 = vector.extract_strided_slice %172 {offsets = [0, 40], sizes = [8, 4], strides = [1, 1]} : vector<8x96xf32> to vector<8x4xf32>
    %211 = vector.extract_strided_slice %172 {offsets = [0, 72], sizes = [8, 4], strides = [1, 1]} : vector<8x96xf32> to vector<8x4xf32>
    "tpu.trace_start"() <{level = 10 : i32, message = "md,nd->mn"}> : () -> ()
    %cst_78 = arith.constant dense<0.000000e+00> : vector<8x8xf32>
    %212 = tpu.matmul %209, %210, %cst_78 {dimension_numbers = #tpu.dot_dimension_numbers<[1], [1], [0], [0], [0, 0, 1, 0], [], []>} : vector<8x4xf32>, vector<8x4xf32>, vector<8x8xf32> -> vector<8x8xf32>
    "tpu.trace_stop"() : () -> ()
    %cst_79 = arith.constant 5.000000e-01 : f32
    %213 = vector.broadcast %cst_79 : f32 to vector<8x8xf32>
    %214 = arith.mulf %212, %213 : vector<8x8xf32>
    %215 = arith.addf %214, %0 : vector<8x8xf32>
    %cst_80 = arith.constant dense<0xFF800000> : vector<8xf32>
    %216 = vector.multi_reduction <maximumf>, %215, %cst_80 [1] : vector<8x8xf32> to vector<8xf32>
    %217 = vector.shape_cast %216 : vector<8xf32> to vector<8x1xf32>
    %218 = vector.broadcast %217 : vector<8x1xf32> to vector<8x8xf32>
    %219 = arith.subf %215, %218 : vector<8x8xf32>
    %220 = math.exp %219 : vector<8x8xf32>
    %cst_81 = arith.constant dense<0.000000e+00> : vector<8xf32>
    %221 = vector.multi_reduction <add>, %220, %cst_81 [1] : vector<8x8xf32> to vector<8xf32>
    %222 = vector.shape_cast %221 : vector<8xf32> to vector<8x1xf32>
    %223 = tpu.reciprocal %222 {approx = true} : vector<8x1xf32> -> vector<8x1xf32>
    %224 = vector.broadcast %223 : vector<8x1xf32> to vector<8x8xf32>
    %225 = arith.mulf %220, %224 : vector<8x8xf32>
    %cst_82 = arith.constant dense<0.000000e+00> : vector<8x4xf32>
    %226 = tpu.matmul %225, %211, %cst_82 {dimension_numbers = #tpu.dot_dimension_numbers<[1], [0], [0], [1], [0, 0, 1, 1], [], []>} : vector<8x8xf32>, vector<8x4xf32>, vector<8x4xf32> -> vector<8x4xf32>
    %227 = vector.extract_strided_slice %172 {offsets = [0, 12], sizes = [8, 4], strides = [1, 1]} : vector<8x96xf32> to vector<8x4xf32>
    %228 = vector.extract_strided_slice %172 {offsets = [0, 44], sizes = [8, 4], strides = [1, 1]} : vector<8x96xf32> to vector<8x4xf32>
    %229 = vector.extract_strided_slice %172 {offsets = [0, 76], sizes = [8, 4], strides = [1, 1]} : vector<8x96xf32> to vector<8x4xf32>
    "tpu.trace_start"() <{level = 10 : i32, message = "md,nd->mn"}> : () -> ()
    %cst_83 = arith.constant dense<0.000000e+00> : vector<8x8xf32>
    %230 = tpu.matmul %227, %228, %cst_83 {dimension_numbers = #tpu.dot_dimension_numbers<[1], [1], [0], [0], [0, 0, 1, 0], [], []>} : vector<8x4xf32>, vector<8x4xf32>, vector<8x8xf32> -> vector<8x8xf32>
    "tpu.trace_stop"() : () -> ()
    %cst_84 = arith.constant 5.000000e-01 : f32
    %231 = vector.broadcast %cst_84 : f32 to vector<8x8xf32>
    %232 = arith.mulf %230, %231 : vector<8x8xf32>
    %233 = arith.addf %232, %0 : vector<8x8xf32>
    %cst_85 = arith.constant dense<0xFF800000> : vector<8xf32>
    %234 = vector.multi_reduction <maximumf>, %233, %cst_85 [1] : vector<8x8xf32> to vector<8xf32>
    %235 = vector.shape_cast %234 : vector<8xf32> to vector<8x1xf32>
    %236 = vector.broadcast %235 : vector<8x1xf32> to vector<8x8xf32>
    %237 = arith.subf %233, %236 : vector<8x8xf32>
    %238 = math.exp %237 : vector<8x8xf32>
    %cst_86 = arith.constant dense<0.000000e+00> : vector<8xf32>
    %239 = vector.multi_reduction <add>, %238, %cst_86 [1] : vector<8x8xf32> to vector<8xf32>
    %240 = vector.shape_cast %239 : vector<8xf32> to vector<8x1xf32>
    %241 = tpu.reciprocal %240 {approx = true} : vector<8x1xf32> -> vector<8x1xf32>
    %242 = vector.broadcast %241 : vector<8x1xf32> to vector<8x8xf32>
    %243 = arith.mulf %238, %242 : vector<8x8xf32>
    %cst_87 = arith.constant dense<0.000000e+00> : vector<8x4xf32>
    %244 = tpu.matmul %243, %229, %cst_87 {dimension_numbers = #tpu.dot_dimension_numbers<[1], [0], [0], [1], [0, 0, 1, 1], [], []>} : vector<8x8xf32>, vector<8x4xf32>, vector<8x4xf32> -> vector<8x4xf32>
    %245 = vector.extract_strided_slice %172 {offsets = [0, 16], sizes = [8, 4], strides = [1, 1]} : vector<8x96xf32> to vector<8x4xf32>
    %246 = vector.extract_strided_slice %172 {offsets = [0, 48], sizes = [8, 4], strides = [1, 1]} : vector<8x96xf32> to vector<8x4xf32>
    %247 = vector.extract_strided_slice %172 {offsets = [0, 80], sizes = [8, 4], strides = [1, 1]} : vector<8x96xf32> to vector<8x4xf32>
    "tpu.trace_start"() <{level = 10 : i32, message = "md,nd->mn"}> : () -> ()
    %cst_88 = arith.constant dense<0.000000e+00> : vector<8x8xf32>
    %248 = tpu.matmul %245, %246, %cst_88 {dimension_numbers = #tpu.dot_dimension_numbers<[1], [1], [0], [0], [0, 0, 1, 0], [], []>} : vector<8x4xf32>, vector<8x4xf32>, vector<8x8xf32> -> vector<8x8xf32>
    "tpu.trace_stop"() : () -> ()
    %cst_89 = arith.constant 5.000000e-01 : f32
    %249 = vector.broadcast %cst_89 : f32 to vector<8x8xf32>
    %250 = arith.mulf %248, %249 : vector<8x8xf32>
    %251 = arith.addf %250, %0 : vector<8x8xf32>
    %cst_90 = arith.constant dense<0xFF800000> : vector<8xf32>
    %252 = vector.multi_reduction <maximumf>, %251, %cst_90 [1] : vector<8x8xf32> to vector<8xf32>
    %253 = vector.shape_cast %252 : vector<8xf32> to vector<8x1xf32>
    %254 = vector.broadcast %253 : vector<8x1xf32> to vector<8x8xf32>
    %255 = arith.subf %251, %254 : vector<8x8xf32>
    %256 = math.exp %255 : vector<8x8xf32>
    %cst_91 = arith.constant dense<0.000000e+00> : vector<8xf32>
    %257 = vector.multi_reduction <add>, %256, %cst_91 [1] : vector<8x8xf32> to vector<8xf32>
    %258 = vector.shape_cast %257 : vector<8xf32> to vector<8x1xf32>
    %259 = tpu.reciprocal %258 {approx = true} : vector<8x1xf32> -> vector<8x1xf32>
    %260 = vector.broadcast %259 : vector<8x1xf32> to vector<8x8xf32>
    %261 = arith.mulf %256, %260 : vector<8x8xf32>
    %cst_92 = arith.constant dense<0.000000e+00> : vector<8x4xf32>
    %262 = tpu.matmul %261, %247, %cst_92 {dimension_numbers = #tpu.dot_dimension_numbers<[1], [0], [0], [1], [0, 0, 1, 1], [], []>} : vector<8x8xf32>, vector<8x4xf32>, vector<8x4xf32> -> vector<8x4xf32>
    %263 = vector.extract_strided_slice %172 {offsets = [0, 20], sizes = [8, 4], strides = [1, 1]} : vector<8x96xf32> to vector<8x4xf32>
    %264 = vector.extract_strided_slice %172 {offsets = [0, 52], sizes = [8, 4], strides = [1, 1]} : vector<8x96xf32> to vector<8x4xf32>
    %265 = vector.extract_strided_slice %172 {offsets = [0, 84], sizes = [8, 4], strides = [1, 1]} : vector<8x96xf32> to vector<8x4xf32>
    "tpu.trace_start"() <{level = 10 : i32, message = "md,nd->mn"}> : () -> ()
    %cst_93 = arith.constant dense<0.000000e+00> : vector<8x8xf32>
    %266 = tpu.matmul %263, %264, %cst_93 {dimension_numbers = #tpu.dot_dimension_numbers<[1], [1], [0], [0], [0, 0, 1, 0], [], []>} : vector<8x4xf32>, vector<8x4xf32>, vector<8x8xf32> -> vector<8x8xf32>
    "tpu.trace_stop"() : () -> ()
    %cst_94 = arith.constant 5.000000e-01 : f32
    %267 = vector.broadcast %cst_94 : f32 to vector<8x8xf32>
    %268 = arith.mulf %266, %267 : vector<8x8xf32>
    %269 = arith.addf %268, %0 : vector<8x8xf32>
    %cst_95 = arith.constant dense<0xFF800000> : vector<8xf32>
    %270 = vector.multi_reduction <maximumf>, %269, %cst_95 [1] : vector<8x8xf32> to vector<8xf32>
    %271 = vector.shape_cast %270 : vector<8xf32> to vector<8x1xf32>
    %272 = vector.broadcast %271 : vector<8x1xf32> to vector<8x8xf32>
    %273 = arith.subf %269, %272 : vector<8x8xf32>
    %274 = math.exp %273 : vector<8x8xf32>
    %cst_96 = arith.constant dense<0.000000e+00> : vector<8xf32>
    %275 = vector.multi_reduction <add>, %274, %cst_96 [1] : vector<8x8xf32> to vector<8xf32>
    %276 = vector.shape_cast %275 : vector<8xf32> to vector<8x1xf32>
    %277 = tpu.reciprocal %276 {approx = true} : vector<8x1xf32> -> vector<8x1xf32>
    %278 = vector.broadcast %277 : vector<8x1xf32> to vector<8x8xf32>
    %279 = arith.mulf %274, %278 : vector<8x8xf32>
    %cst_97 = arith.constant dense<0.000000e+00> : vector<8x4xf32>
    %280 = tpu.matmul %279, %265, %cst_97 {dimension_numbers = #tpu.dot_dimension_numbers<[1], [0], [0], [1], [0, 0, 1, 1], [], []>} : vector<8x8xf32>, vector<8x4xf32>, vector<8x4xf32> -> vector<8x4xf32>
    %281 = vector.extract_strided_slice %172 {offsets = [0, 24], sizes = [8, 4], strides = [1, 1]} : vector<8x96xf32> to vector<8x4xf32>
    %282 = vector.extract_strided_slice %172 {offsets = [0, 56], sizes = [8, 4], strides = [1, 1]} : vector<8x96xf32> to vector<8x4xf32>
    %283 = vector.extract_strided_slice %172 {offsets = [0, 88], sizes = [8, 4], strides = [1, 1]} : vector<8x96xf32> to vector<8x4xf32>
    "tpu.trace_start"() <{level = 10 : i32, message = "md,nd->mn"}> : () -> ()
    %cst_98 = arith.constant dense<0.000000e+00> : vector<8x8xf32>
    %284 = tpu.matmul %281, %282, %cst_98 {dimension_numbers = #tpu.dot_dimension_numbers<[1], [1], [0], [0], [0, 0, 1, 0], [], []>} : vector<8x4xf32>, vector<8x4xf32>, vector<8x8xf32> -> vector<8x8xf32>
    "tpu.trace_stop"() : () -> ()
    %cst_99 = arith.constant 5.000000e-01 : f32
    %285 = vector.broadcast %cst_99 : f32 to vector<8x8xf32>
    %286 = arith.mulf %284, %285 : vector<8x8xf32>
    %287 = arith.addf %286, %0 : vector<8x8xf32>
    %cst_100 = arith.constant dense<0xFF800000> : vector<8xf32>
    %288 = vector.multi_reduction <maximumf>, %287, %cst_100 [1] : vector<8x8xf32> to vector<8xf32>
    %289 = vector.shape_cast %288 : vector<8xf32> to vector<8x1xf32>
    %290 = vector.broadcast %289 : vector<8x1xf32> to vector<8x8xf32>
    %291 = arith.subf %287, %290 : vector<8x8xf32>
    %292 = math.exp %291 : vector<8x8xf32>
    %cst_101 = arith.constant dense<0.000000e+00> : vector<8xf32>
    %293 = vector.multi_reduction <add>, %292, %cst_101 [1] : vector<8x8xf32> to vector<8xf32>
    %294 = vector.shape_cast %293 : vector<8xf32> to vector<8x1xf32>
    %295 = tpu.reciprocal %294 {approx = true} : vector<8x1xf32> -> vector<8x1xf32>
    %296 = vector.broadcast %295 : vector<8x1xf32> to vector<8x8xf32>
    %297 = arith.mulf %292, %296 : vector<8x8xf32>
    %cst_102 = arith.constant dense<0.000000e+00> : vector<8x4xf32>
    %298 = tpu.matmul %297, %283, %cst_102 {dimension_numbers = #tpu.dot_dimension_numbers<[1], [0], [0], [1], [0, 0, 1, 1], [], []>} : vector<8x8xf32>, vector<8x4xf32>, vector<8x4xf32> -> vector<8x4xf32>
    %299 = vector.extract_strided_slice %172 {offsets = [0, 28], sizes = [8, 4], strides = [1, 1]} : vector<8x96xf32> to vector<8x4xf32>
    %300 = vector.extract_strided_slice %172 {offsets = [0, 60], sizes = [8, 4], strides = [1, 1]} : vector<8x96xf32> to vector<8x4xf32>
    %301 = vector.extract_strided_slice %172 {offsets = [0, 92], sizes = [8, 4], strides = [1, 1]} : vector<8x96xf32> to vector<8x4xf32>
    "tpu.trace_start"() <{level = 10 : i32, message = "md,nd->mn"}> : () -> ()
    %cst_103 = arith.constant dense<0.000000e+00> : vector<8x8xf32>
    %302 = tpu.matmul %299, %300, %cst_103 {dimension_numbers = #tpu.dot_dimension_numbers<[1], [1], [0], [0], [0, 0, 1, 0], [], []>} : vector<8x4xf32>, vector<8x4xf32>, vector<8x8xf32> -> vector<8x8xf32>
    "tpu.trace_stop"() : () -> ()
    %cst_104 = arith.constant 5.000000e-01 : f32
    %303 = vector.broadcast %cst_104 : f32 to vector<8x8xf32>
    %304 = arith.mulf %302, %303 : vector<8x8xf32>
    %305 = arith.addf %304, %0 : vector<8x8xf32>
    %cst_105 = arith.constant dense<0xFF800000> : vector<8xf32>
    %306 = vector.multi_reduction <maximumf>, %305, %cst_105 [1] : vector<8x8xf32> to vector<8xf32>
    %307 = vector.shape_cast %306 : vector<8xf32> to vector<8x1xf32>
    %308 = vector.broadcast %307 : vector<8x1xf32> to vector<8x8xf32>
    %309 = arith.subf %305, %308 : vector<8x8xf32>
    %310 = math.exp %309 : vector<8x8xf32>
    %cst_106 = arith.constant dense<0.000000e+00> : vector<8xf32>
    %311 = vector.multi_reduction <add>, %310, %cst_106 [1] : vector<8x8xf32> to vector<8xf32>
    %312 = vector.shape_cast %311 : vector<8xf32> to vector<8x1xf32>
    %313 = tpu.reciprocal %312 {approx = true} : vector<8x1xf32> -> vector<8x1xf32>
    %314 = vector.broadcast %313 : vector<8x1xf32> to vector<8x8xf32>
    %315 = arith.mulf %310, %314 : vector<8x8xf32>
    %cst_107 = arith.constant dense<0.000000e+00> : vector<8x4xf32>
    %316 = tpu.matmul %315, %301, %cst_107 {dimension_numbers = #tpu.dot_dimension_numbers<[1], [0], [0], [1], [0, 0, 1, 1], [], []>} : vector<8x8xf32>, vector<8x4xf32>, vector<8x4xf32> -> vector<8x4xf32>
    %317 = tpu.concatenate %190, %208, %226, %244, %262, %280, %298, %316 in 1 : vector<8x4xf32>, vector<8x4xf32>, vector<8x4xf32>, vector<8x4xf32>, vector<8x4xf32>, vector<8x4xf32>, vector<8x4xf32>, vector<8x4xf32> -> vector<8x32xf32>
    %cst_108 = arith.constant dense<0.000000e+00> : vector<8x32xf32>
    %318 = tpu.matmul %317, %167, %cst_108 {dimension_numbers = #tpu.dot_dimension_numbers<[1], [0], [0], [1], [0, 0, 1, 1], [], []>} : vector<8x32xf32>, vector<32x32xf32>, vector<8x32xf32> -> vector<8x32xf32>
    %319 = vector.broadcast %169 : vector<1x32xf32> to vector<8x32xf32>
    %320 = arith.addf %318, %319 : vector<8x32xf32>
    %321 = arith.addf %320, %161 : vector<8x32xf32>
    %c0_109 = arith.constant 0 : index
    %c0_110 = arith.constant 0 : index
    %322 = vector.load %arg7[%c0_109, %c0_110] : memref<8x32xf32, #tpu.memory_space<vmem>>, vector<8x32xf32>
    tpu.vector_store %arg7[%c0_109, %c0_110], %321 {strides = array<i32>} : memref<8x32xf32, #tpu.memory_space<vmem>>, vector<8x32xf32>,
    return
  }
  func.func @transform_0(%arg0: i32) -> (i32, i32) {
    %c0_i32 = arith.constant 0 : i32
    %c0_i32_0 = arith.constant 0 : i32
    return %arg0, %c0_i32 : i32, i32
  }
  func.func @transform_1(%arg0: i32) -> (i32, i32) {
    %c0_i32 = arith.constant 0 : i32
    %c0_i32_0 = arith.constant 0 : i32
    %c0_i32_1 = arith.constant 0 : i32
    return %c0_i32, %c0_i32_0 : i32, i32
  }
  func.func @transform_2(%arg0: i32) -> (i32, i32, i32) {
    %c0_i32 = arith.constant 0 : i32
    %c0_i32_0 = arith.constant 0 : i32
    %c0_i32_1 = arith.constant 0 : i32
    %c0_i32_2 = arith.constant 0 : i32
    return %c0_i32, %c0_i32_0, %c0_i32_1 : i32, i32, i32
  }
  func.func @transform_3(%arg0: i32) -> (i32, i32, i32) {
    %c0_i32 = arith.constant 0 : i32
    %c0_i32_0 = arith.constant 0 : i32
    %c0_i32_1 = arith.constant 0 : i32
    %c0_i32_2 = arith.constant 0 : i32
    return %c0_i32, %c0_i32_0, %c0_i32_1 : i32, i32, i32
  }
  func.func @transform_4(%arg0: i32) -> (i32, i32, i32) {
    %c0_i32 = arith.constant 0 : i32
    %c0_i32_0 = arith.constant 0 : i32
    %c0_i32_1 = arith.constant 0 : i32
    %c0_i32_2 = arith.constant 0 : i32
    return %c0_i32, %c0_i32_0, %c0_i32_1 : i32, i32, i32
  }
  func.func @transform_5(%arg0: i32) -> (i32, i32, i32) {
    %c0_i32 = arith.constant 0 : i32
    %c0_i32_0 = arith.constant 0 : i32
    %c0_i32_1 = arith.constant 0 : i32
    %c0_i32_2 = arith.constant 0 : i32
    return %c0_i32, %c0_i32_0, %c0_i32_1 : i32, i32, i32
  }
  func.func @transform_6(%arg0: i32) -> (i32, i32) {
    %c0_i32 = arith.constant 0 : i32
    %c0_i32_0 = arith.constant 0 : i32
    return %arg0, %c0_i32 : i32, i32
  }
}

</mosaic_0001>

<llo_original>
// kernel: attation_cov_forward.3
$region0: #{attation_cov_forward.3}
  #allocation0 [shape = 'u32[]', space=smem, size = 0x4, offset = 0x4, fixed_abs, tag = 'smem constant byte address 0x4 - core index']
  #allocation1 [shape = 'u32[72,128]{1,0:T(1,128)}', space=vmem, size = 0x9000, scoped, tag = 'internal scratch']
  %s0 = inlined_call_operand.vmem [shape: f32[16,32], index: 0, kind: input, shape index: {}]
  %s1 = inlined_call_operand.vmem [shape: f32[32,48], index: 1, kind: input, shape index: {}]
  %s2 = inlined_call_operand.vmem [shape: f32[3,8,8], index: 2, kind: input, shape index: {}]
  %s3 = inlined_call_operand.vmem [shape: f32[8,16], index: 3, kind: input, shape index: {}]
  %s4 = inlined_call_operand.hbm [shape: f32[16,16], index: 4, kind: output, shape index: {}]
  %s5 = sld [smem:[#allocation0]]
  $region49: #{attation_cov_forward.3} parent=0
    _
  %s7 = ssub.s32 1, %s5
  %s8 = scalar_select 0, %s7, %s5
  $region1: #{attation_cov_forward.3} parent=0
    #allocation2 [shape = 'u8[8192]{0}', space=vmem, size = 0x2000, scoped, tag = 'output window, operand 0']
    #allocation3 [shape = 's32[2]{0}', space=sflag, size = 0x8, scoped, tag = 'scoped memory for attation_cov_forward.3']
    %9 = vsyncpa [#allocation3], 0
    %s10 = scalar_lea.sflag [#allocation3], 1
    %11 = vsyncpa %s10, 0
    loop: start=0, step=1, limit=4
    $region2: #{attation_cov_forward.3} parent=1 // loop_pre_header
      _
    $region3: #{attation_cov_forward.3} parent=1 // loop_header
      %s13 = sphi 0, %s17
      %p14 = scmp.ge.s32.totalorder %s13, 4
      %s23 = sphi 0, %s25
      %s26 = sphi 0, %s23
      %s27 = sphi 0, %s26
      %s43 = sphi 0, %s27
      %s47 = sphi 0, %s47
      %s49 = sphi 0, %s47
      %s50 = sphi 0, %s49
      %s64 = sphi 0, %s50
      %s68 = sphi 0, %s68
      %s70 = sphi 0, %s68
      %s71 = sphi 0, %s70
      %s85 = sphi 0, %s71
      %s89 = sphi 0, %s89
      %s91 = sphi 0, %s89
      %s92 = sphi 0, %s91
      %s106 = sphi 0, %s92
      %s112 = sphi 0, %s114
      %s115 = sphi 0, %s112
      %s116 = sphi 0, %s115
      %s132 = sphi 0, %s116
    $region4: #{attation_cov_forward.3} parent=1 // loop_header_branch
      %16 = sbr.rel (%p14) target = $region8
    $region5: #{attation_cov_forward.3} parent=1 // loop_body
      %s18 = ssub.s32 %s13, 1
      %s19 = ssub.s32 %s13, 2
      %s20 = sadd.s32 %s13, 1
      %s21 = ssub.s32 %s13, %s20
      %p22 = scmp.eq.s32.totalorder %s21, 0
      %s24 = sadd.s32 %s23, 1
      %s25 = scalar_select %p22, %s23, %s24
      %p28 = pneg %p22
      %p29 = scmp.eq.s32.totalorder %s13, 1
      %p30 = por %p28, %p29
      %p31 = scmp.ne.s32.totalorder %s23, %s26
      %p32 = scmp.eq.s32.totalorder %s13, 0
      %p33 = por %p31, %p32
      %p34 = scmp.ne.s32.totalorder %s23, %s26
      %p35 = scmp.eq.s32.totalorder %s18, 1
      %p36 = por %p34, %p35
      %p37 = scmp.ne.s32.totalorder %s26, %s27
      %p38 = scmp.eq.s32.totalorder %s18, 0
      %p39 = por %p37, %p38
      %p40 = scmp.ne.s32.totalorder %s26, %s27
      %p41 = scmp.eq.s32.totalorder %s19, 1
      %p42 = por %p40, %p41
      %p44 = scmp.ne.s32.totalorder %s27, %s43
      %p45 = scmp.eq.s32.totalorder %s19, 0
      %p46 = por %p44, %p45
      %s48 = sadd.s32 %s47, 1
      %p51 = scmp.eq.s32.totalorder %s13, 1
      %p52 = scmp.ne.s32.totalorder %s47, %s49
      %p53 = scmp.eq.s32.totalorder %s13, 0
      %p54 = por %p52, %p53
      %p55 = scmp.ne.s32.totalorder %s47, %s49
      %p56 = scmp.eq.s32.totalorder %s18, 1
      %p57 = por %p55, %p56
      %p58 = scmp.ne.s32.totalorder %s49, %s50
      %p59 = scmp.eq.s32.totalorder %s18, 0
      %p60 = por %p58, %p59
      %p61 = scmp.ne.s32.totalorder %s49, %s50
      %p62 = scmp.eq.s32.totalorder %s19, 1
      %p63 = por %p61, %p62
      %p65 = scmp.ne.s32.totalorder %s50, %s64
      %p66 = scmp.eq.s32.totalorder %s19, 0
      %p67 = por %p65, %p66
      %s69 = sadd.s32 %s68, 1
      %p72 = scmp.eq.s32.totalorder %s13, 1
      %p73 = scmp.ne.s32.totalorder %s68, %s70
      %p74 = scmp.eq.s32.totalorder %s13, 0
      %p75 = por %p73, %p74
      %p76 = scmp.ne.s32.totalorder %s68, %s70
      %p77 = scmp.eq.s32.totalorder %s18, 1
      %p78 = por %p76, %p77
      %p79 = scmp.ne.s32.totalorder %s70, %s71
      %p80 = scmp.eq.s32.totalorder %s18, 0
      %p81 = por %p79, %p80
      %p82 = scmp.ne.s32.totalorder %s70, %s71
      %p83 = scmp.eq.s32.totalorder %s19, 1
      %p84 = por %p82, %p83
      %p86 = scmp.ne.s32.totalorder %s71, %s85
      %p87 = scmp.eq.s32.totalorder %s19, 0
      %p88 = por %p86, %p87
      %s90 = sadd.s32 %s89, 1
      %p93 = scmp.eq.s32.totalorder %s13, 1
      %p94 = scmp.ne.s32.totalorder %s89, %s91
      %p95 = scmp.eq.s32.totalorder %s13, 0
      %p96 = por %p94, %p95
      %p97 = scmp.ne.s32.totalorder %s89, %s91
      %p98 = scmp.eq.s32.totalorder %s18, 1
      %p99 = por %p97, %p98
      %p100 = scmp.ne.s32.totalorder %s91, %s92
      %p101 = scmp.eq.s32.totalorder %s18, 0
      %p102 = por %p100, %p101
      %p103 = scmp.ne.s32.totalorder %s91, %s92
      %p104 = scmp.eq.s32.totalorder %s19, 1
      %p105 = por %p103, %p104
      %p107 = scmp.ne.s32.totalorder %s92, %s106
      %p108 = scmp.eq.s32.totalorder %s19, 0
      %p109 = por %p107, %p108
      %s110 = ssub.s32 %s13, %s20
      %p111 = scmp.eq.s32.totalorder %s110, 0
      %s113 = sadd.s32 %s112, 1
      %s114 = scalar_select %p111, %s112, %s113
      %p117 = pneg %p111
      %p118 = scmp.eq.s32.totalorder %s13, 1
      %p119 = por %p117, %p118
      %p120 = scmp.ne.s32.totalorder %s112, %s115
      %p121 = scmp.eq.s32.totalorder %s13, 0
      %p122 = por %p120, %p121
      %p123 = scmp.ne.s32.totalorder %s112, %s115
      %p124 = scmp.eq.s32.totalorder %s18, 1
      %p125 = por %p123, %p124
      %p126 = scmp.ne.s32.totalorder %s115, %s116
      %p127 = scmp.eq.s32.totalorder %s18, 0
      %p128 = por %p126, %p127
      %p129 = scmp.ne.s32.totalorder %s115, %s116
      %p130 = scmp.eq.s32.totalorder %s19, 1
      %p131 = por %p129, %p130
      %p133 = scmp.ne.s32.totalorder %s116, %s132
      %p134 = scmp.eq.s32.totalorder %s19, 0
      %p135 = por %p133, %p134
      %p136 = scmp.le.s32.totalorder 1, %s13
      %p137 = scmp.lt.s32.totalorder %s13, 3
      %p138 = pnand %p136, %p137
      %p139 = pneg %p138
      // Predicated region
      $region9: #{attation_cov_forward.3} parent=5 // pred_check
        _
      $region10: #{attation_cov_forward.3} parent=5 // pred_check_branch
        %141 = sbr.rel (%p138) target = $region12
      $region11: #{attation_cov_forward.3} parent=5 // pred_region
        %s142 = ssub.s32 %s13, 1
        // Predicated region
        $region13: #{attation_cov_forward.3} parent=11 // pred_check
          %p143 = pneg %p60
        $region14: #{attation_cov_forward.3} parent=11 // pred_check_branch
          %145 = sbr.rel (%p143) target = $region16
        $region15: #{attation_cov_forward.3} parent=11 // pred_region
          _
        $region16: #{attation_cov_forward.3} parent=11 // pred_fallthru
          _
        // Predicated region
        $region17: #{attation_cov_forward.3} parent=11 // pred_check
          %p146 = pneg %p81
        $region18: #{attation_cov_forward.3} parent=11 // pred_check_branch
          %148 = sbr.rel (%p146) target = $region20
        $region19: #{attation_cov_forward.3} parent=11 // pred_region
          _
        $region20: #{attation_cov_forward.3} parent=11 // pred_fallthru
          _
        // Predicated region
        $region21: #{attation_cov_forward.3} parent=11 // pred_check
          %p149 = pneg %p102
        $region22: #{attation_cov_forward.3} parent=11 // pred_check_branch
          %151 = sbr.rel (%p149) target = $region24
        $region23: #{attation_cov_forward.3} parent=11 // pred_region
          _
        $region24: #{attation_cov_forward.3} parent=11 // pred_fallthru
          _
      $region12: #{attation_cov_forward.3} parent=5 // pred_fallthru
        _
      %p152 = scmp.lt.s32.totalorder %s13, 2
      // Predicated region
      $region25: #{attation_cov_forward.3} parent=5 // pred_check
        %p153 = pneg %p152
      $region26: #{attation_cov_forward.3} parent=5 // pred_check_branch
        %155 = sbr.rel (%p153) target = $region28
      $region27: #{attation_cov_forward.3} parent=5 // pred_region
        // Predicated region
        $region29: #{attation_cov_forward.3} parent=27 // pred_check
          %p156 = pneg %p33
        $region30: #{attation_cov_forward.3} parent=27 // pred_check_branch
          %158 = sbr.rel (%p156) target = $region32
        $region31: #{attation_cov_forward.3} parent=27 // pred_region
          %p159 = scmp.lt.s32.totalorder %s13, 1
          %s160 = scalar_select %p159, %s13, 1
          %s161 = smul.addr %s160, 8
          %s162 = scalar_lea.vmem %s0, %s161
        $region32: #{attation_cov_forward.3} parent=27 // pred_fallthru
          _
      $region28: #{attation_cov_forward.3} parent=5 // pred_fallthru
        _
      %p163 = scmp.le.s32.totalorder 1, %s13
      %p164 = scmp.lt.s32.totalorder %s13, 3
      %p165 = pnand %p163, %p164
      %p166 = pneg %p165
      // Predicated region
      $region33: #{attation_cov_forward.3} parent=5 // pred_check
        _
      $region34: #{attation_cov_forward.3} parent=5 // pred_check_branch
        %168 = sbr.rel (%p165) target = $region36
      $region35: #{attation_cov_forward.3} parent=5 // pred_region
        %s169 = ssub.s32 %s13, 1
        %p170 = scmp.lt.s32.totalorder %s18, 1
        %s171 = scalar_select %p170, %s18, 1
        %s172 = smul.addr %s171, 8
        %s173 = scalar_lea.vmem %s0, %s172
        %p174 = pneg %p39
        %p175 = pneg %p36
        %p176 = pneg %p60
        %p177 = pneg %p57
        %p178 = pneg %p81
        %p179 = pneg %p78
        %p180 = pneg %p102
        %p181 = pneg %p99
        %p182 = pneg %p128
        %p183 = pneg %p125
        %s184 = sand.u32 %s115, 1
        %s185 = scalar_lea.sflag [#allocation3], %s184
        %s186 = sand.u32 %s115, 1
        %s187 = smul.addr %s186, 8
        %s188 = scalar_lea.vmem [#allocation2], %s187
        %p189 = scmp.lt.s32.totalorder %s18, 1
        %s190 = scalar_select %p189, %s18, 1
        %s191 = smul.addr %s190, 8
        %s192 = scalar_lea.vmem %s0, %s191
        %v193 = vld [vmem:[%s192] sm:$0xff]
        %v194 = vld [vmem:[%s1] sm:$0xff]
        %v195 = vld [vmem:[%s1 + $0x8] sm:$0xff]
        %v196 = vld [vmem:[%s1 + $0x10] sm:$0xff]
        %v197 = vld [vmem:[%s1 + $0x18] sm:$0xff]
        %vm198 = vcmask 261120
        %v200 = vsel %vm198, %v193, 0
        %202 = vmatpush.msra.mxu0 0.0
        %203 = vmatpush.msra.mxu0 0.0
        %204 = vmatpush.msra.mxu0 0.0
        %205 = vmatpush.msra.mxu0 0.0
        %206 = vmatpush.msra.mxu0 0.0
        %207 = vmatpush.msra.mxu0 0.0
        %208 = vmatpush.msra.mxu0 0.0
        %209 = vmatpush.msra.mxu0 0.0
        %210 = vmatpush.msra.mxu0 0.0
        %211 = vmatpush.msra.mxu0 0.0
        %212 = vmatpush.msra.mxu0 0.0
        %213 = vmatpush.msra.mxu0 0.0
        %214 = vmatpush.msra.mxu0 %v197
        %215 = vmatpush.msra.mxu0 %v196
        %216 = vmatpush.msra.mxu0 %v195
        %217 = vmatpush.msra.mxu0 %v194
        %218 = vmatmul.f32.gmra.mxu0 %v200
        %v219 = vpop.f32.mrf.mxu0
        %v220 = vadd.f32 0.0, %v219
        %221 = vdwg.mxu0
        %v222 = vld [vmem:[%s2] sm:$0xff]
        %s223 = scalar_lea.vmem %s2, 8
        %v224 = vld [vmem:[%s223] sm:$0xff]
        %s225 = scalar_lea.vmem %s2, 16
        %v226 = vld [vmem:[%s225] sm:$0xff]
        %v227 = vld [vmem:[%s3] sm:$0xff]
        %229 = vrot.lane.b32.xlu0 %v220, 112
        %v230 = vpop.permute.xlu0 %229
        %vm232 = vcmask 64512
        %v234 = vsel %vm232, %v224, 0
        %236 = vmatpush.msra.mxu0 0.0
        %237 = vmatpush.msra.mxu0 0.0
        %238 = vmatpush.msra.mxu0 0.0
        %239 = vmatpush.msra.mxu0 0.0
        %240 = vmatpush.msra.mxu0 0.0
        %241 = vmatpush.msra.mxu0 0.0
        %242 = vmatpush.msra.mxu0 0.0
        %243 = vmatpush.msra.mxu0 0.0
        %244 = vmatpush.msra.mxu0 0.0
        %245 = vmatpush.msra.mxu0 0.0
        %246 = vmatpush.msra.mxu0 0.0
        %247 = vmatpush.msra.mxu0 0.0
        %248 = vmatpush.msra.mxu0 0.0
        %249 = vmatpush.msra.mxu0 0.0
        %250 = vmatpush.msra.mxu0 0.0
        %251 = vmatpush.msra.mxu0 %v230
        %252 = vmatmul.f32.gmra.mxu0 %v234
        %v253 = vpop.f32.mrf.mxu0
        %v254 = vadd.f32 0.0, %v253
        %255 = vdwg.mxu0
        %v257 = vsel %vm232, %v222, 0
        %259 = vmatpush.msra.mxu0 0.0
        %260 = vmatpush.msra.mxu0 0.0
        %261 = vmatpush.msra.mxu0 0.0
        %262 = vmatpush.msra.mxu0 0.0
        %263 = vmatpush.msra.mxu0 0.0
        %264 = vmatpush.msra.mxu0 0.0
        %265 = vmatpush.msra.mxu0 0.0
        %266 = vmatpush.msra.mxu0 0.0
        %267 = vmatpush.msra.mxu0 0.0
        %268 = vmatpush.msra.mxu0 0.0
        %269 = vmatpush.msra.mxu0 0.0
        %270 = vmatpush.msra.mxu0 0.0
        %271 = vmatpush.msra.mxu0 0.0
        %272 = vmatpush.msra.mxu0 0.0
        %273 = vmatpush.msra.mxu0 0.0
        %274 = vmatpush.msra.mxu0 %v220
        %275 = vmatmul.f32.gmra.mxu0 %v257
        %v276 = vpop.f32.mrf.mxu0
        %v277 = vadd.f32 %v254, %v276
        %278 = vdwg.mxu0
        %279 = vrot.lane.b32.xlu0 %v220, 96
        %v280 = vpop.permute.xlu0 %279
        %v283 = vsel %vm232, %v226, 0
        %285 = vmatpush.msra.mxu0 0.0
        %286 = vmatpush.msra.mxu0 0.0
        %287 = vmatpush.msra.mxu0 0.0
        %288 = vmatpush.msra.mxu0 0.0
        %289 = vmatpush.msra.mxu0 0.0
        %290 = vmatpush.msra.mxu0 0.0
        %291 = vmatpush.msra.mxu0 0.0
        %292 = vmatpush.msra.mxu0 0.0
        %293 = vmatpush.msra.mxu0 0.0
        %294 = vmatpush.msra.mxu0 0.0
        %295 = vmatpush.msra.mxu0 0.0
        %296 = vmatpush.msra.mxu0 0.0
        %297 = vmatpush.msra.mxu0 0.0
        %298 = vmatpush.msra.mxu0 0.0
        %299 = vmatpush.msra.mxu0 0.0
        %300 = vmatpush.msra.mxu0 %v280
        %301 = vmatmul.f32.gmra.mxu0 %v283
        %v302 = vpop.f32.mrf.mxu0
        %v303 = vadd.f32 0.0, %v302
        %304 = vdwg.mxu0
        %v305 = vadd.f32 %v277, %v303
        %v306 = vadd.f32 %v305, %v227
        %vm307 = vcmask 130048
        %308 = vst.msk [vmem:[%s188] sm:$0xff] %vm307, %v306
        %s309 = sand.u32 %s115, 1
        %s310 = scalar_lea.sflag [#allocation3], %s309
        %s311 = sand.u32 %s115, 1
        %s312 = smul.addr %s311, 8
        %s313 = scalar_lea.vmem [#allocation2], %s312
        // Predicated region
        $region37: #{attation_cov_forward.3} parent=35 // pred_check
          %p314 = pneg %p125
        $region38: #{attation_cov_forward.3} parent=35 // pred_check_branch
          %316 = sbr.rel (%p314) target = $region40
        $region39: #{attation_cov_forward.3} parent=35 // pred_region
          %318 = vsyncadd %s310, 0
          %s319 = smul.addr %s18, 8
          %s320 = scalar_lea.hbm %s4, %s319
          %s322 = sshll.u32 %s313, 4
          %s323 = int_to_ptr.vmem [resolvable:$true] %s322
          %s324 = sshll.u32 %s320, 4
          %s325 = int_to_ptr.hbm [resolvable:$true] %s324
          %327 = dma.vmem_to_hbm [thread:$0]  %s323, 128, %s325, %s310
        $region40: #{attation_cov_forward.3} parent=35 // pred_fallthru
          _
      $region36: #{attation_cov_forward.3} parent=5 // pred_fallthru
        _
      %p328 = scmp.le.s32.totalorder 2, %s13
      // Predicated region
      $region41: #{attation_cov_forward.3} parent=5 // pred_check
        %p329 = pneg %p328
      $region42: #{attation_cov_forward.3} parent=5 // pred_check_branch
        %331 = sbr.rel (%p329) target = $region44
      $region43: #{attation_cov_forward.3} parent=5 // pred_region
        %s332 = ssub.s32 %s13, 2
        // Predicated region
        $region45: #{attation_cov_forward.3} parent=43 // pred_check
          %p333 = pneg %p131
        $region46: #{attation_cov_forward.3} parent=43 // pred_check_branch
          %335 = sbr.rel (%p333) target = $region48
        $region47: #{attation_cov_forward.3} parent=43 // pred_region
          %s336 = sand.u32 %s116, 1
          %s337 = scalar_lea.sflag [#allocation3], %s336
          %s338 = sand.u32 %s116, 1
          %s339 = smul.addr %s338, 8
          %s340 = scalar_lea.vmem [#allocation2], %s339
          %342 = dma.done %s337, 128
        $region48: #{attation_cov_forward.3} parent=43 // pred_fallthru
          _
      $region44: #{attation_cov_forward.3} parent=5 // pred_fallthru
        _
    $region6: #{attation_cov_forward.3} parent=1 // loop_footer
      %s17 = sadd.s32 1, %s13
    $region7: #{attation_cov_forward.3} parent=1 // loop_footer_branch
      %12 = sbr.rel target = $region3
    $region8: #{attation_cov_forward.3} parent=1 // loop_exit
      _
    %343 = vsyncpa [#allocation3], 1
    %s344 = scalar_lea.sflag [#allocation3], 1
    %345 = vsyncpa %s344, 1

// kernel: attation_cov_forward.2
$region0: #{attation_cov_forward.2}
  #allocation0 [shape = 'u32[]', space=smem, size = 0x4, offset = 0x4, fixed_abs, tag = 'smem constant byte address 0x4 - core index']
  #allocation1 [shape = 'u32[72,128]{1,0:T(1,128)}', space=vmem, size = 0x9000, scoped, tag = 'internal scratch']
  %s0 = inlined_call_operand.vmem [shape: f32[16,32], index: 0, kind: input, shape index: {}]
  %s1 = inlined_call_operand.vmem [shape: f32[8,8], index: 1, kind: input, shape index: {}]
  %s2 = inlined_call_operand.hbm [shape: f32[2,32,96], index: 2, kind: input, shape index: {}]
  %s3 = inlined_call_operand.hbm [shape: f32[2,1,96], index: 3, kind: input, shape index: {}]
  %s4 = inlined_call_operand.hbm [shape: f32[2,32,32], index: 4, kind: input, shape index: {}]
  %s5 = inlined_call_operand.hbm [shape: f32[2,1,32], index: 5, kind: input, shape index: {}]
  %s6 = inlined_call_operand.vmem [shape: f32[16,32], index: 6, kind: output, shape index: {}]
  %s7 = sld [smem:[#allocation0]]
  $region73: #{attation_cov_forward.2} parent=0
    _
  %s9 = ssub.s32 1, %s7
  %s10 = scalar_select 0, %s9, %s7
  $region1: #{attation_cov_forward.2} parent=0
    #allocation2 [shape = 'u8[32768]{0}', space=vmem, size = 0x8000, scoped, tag = 'input window, operand 2, single buffered']
    #allocation3 [shape = 's32[2]{0}', space=sflag, size = 0x8, scoped, tag = 'scoped memory for attation_cov_forward.2']
    #allocation4 [shape = 'u8[1024]{0}', space=vmem, size = 0x400, scoped, tag = 'input window, operand 3, single buffered']
    #allocation5 [shape = 's32[1]{0}', space=sflag, size = 0x4, scoped, tag = 'scoped memory for attation_cov_forward.2']
    #allocation6 [shape = 'u8[32768]{0}', space=vmem, size = 0x8000, scoped, tag = 'input window, operand 4, single buffered']
    #allocation7 [shape = 'u8[1024]{0}', space=vmem, size = 0x400, scoped, tag = 'input window, operand 5, single buffered']
    #allocation8 [shape = 's32[1]{0}', space=sflag, size = 0x4, scoped, tag = 'scoped memory for attation_cov_forward.2']
    %11 = vsyncpa [#allocation3], 0
    %12 = vsyncpa [#allocation5], 0
    %13 = vsyncpa [#allocation8], 0
    loop: start=0, step=1, limit=4
    $region2: #{attation_cov_forward.2} parent=1 // loop_pre_header
      _
    $region3: #{attation_cov_forward.2} parent=1 // loop_header
      %s15 = sphi 0, %s19
      %p16 = scmp.ge.s32.totalorder %s15, 4
      %s25 = sphi 0, %s27
      %s28 = sphi 0, %s25
      %s29 = sphi 0, %s28
      %s45 = sphi 0, %s29
      %s49 = sphi 0, %s49
      %s51 = sphi 0, %s49
      %s52 = sphi 0, %s51
      %s66 = sphi 0, %s52
      %s70 = sphi 0, %s70
      %s72 = sphi 0, %s70
      %s73 = sphi 0, %s72
      %s87 = sphi 0, %s73
      %s91 = sphi 0, %s91
      %s93 = sphi 0, %s91
      %s94 = sphi 0, %s93
      %s108 = sphi 0, %s94
      %s112 = sphi 0, %s112
      %s114 = sphi 0, %s112
      %s115 = sphi 0, %s114
      %s129 = sphi 0, %s115
      %s133 = sphi 0, %s133
      %s135 = sphi 0, %s133
      %s136 = sphi 0, %s135
      %s150 = sphi 0, %s136
      %s156 = sphi 0, %s158
      %s159 = sphi 0, %s156
      %s160 = sphi 0, %s159
      %s176 = sphi 0, %s160
    $region4: #{attation_cov_forward.2} parent=1 // loop_header_branch
      %18 = sbr.rel (%p16) target = $region8
    $region5: #{attation_cov_forward.2} parent=1 // loop_body
      %s20 = ssub.s32 %s15, 1
      %s21 = ssub.s32 %s15, 2
      %s22 = sadd.s32 %s15, 1
      %s23 = ssub.s32 %s15, %s22
      %p24 = scmp.eq.s32.totalorder %s23, 0
      %s26 = sadd.s32 %s25, 1
      %s27 = scalar_select %p24, %s25, %s26
      %p30 = pneg %p24
      %p31 = scmp.eq.s32.totalorder %s15, 1
      %p32 = por %p30, %p31
      %p33 = scmp.ne.s32.totalorder %s25, %s28
      %p34 = scmp.eq.s32.totalorder %s15, 0
      %p35 = por %p33, %p34
      %p36 = scmp.ne.s32.totalorder %s25, %s28
      %p37 = scmp.eq.s32.totalorder %s20, 1
      %p38 = por %p36, %p37
      %p39 = scmp.ne.s32.totalorder %s28, %s29
      %p40 = scmp.eq.s32.totalorder %s20, 0
      %p41 = por %p39, %p40
      %p42 = scmp.ne.s32.totalorder %s28, %s29
      %p43 = scmp.eq.s32.totalorder %s21, 1
      %p44 = por %p42, %p43
      %p46 = scmp.ne.s32.totalorder %s29, %s45
      %p47 = scmp.eq.s32.totalorder %s21, 0
      %p48 = por %p46, %p47
      %s50 = sadd.s32 %s49, 1
      %p53 = scmp.eq.s32.totalorder %s15, 1
      %p54 = scmp.ne.s32.totalorder %s49, %s51
      %p55 = scmp.eq.s32.totalorder %s15, 0
      %p56 = por %p54, %p55
      %p57 = scmp.ne.s32.totalorder %s49, %s51
      %p58 = scmp.eq.s32.totalorder %s20, 1
      %p59 = por %p57, %p58
      %p60 = scmp.ne.s32.totalorder %s51, %s52
      %p61 = scmp.eq.s32.totalorder %s20, 0
      %p62 = por %p60, %p61
      %p63 = scmp.ne.s32.totalorder %s51, %s52
      %p64 = scmp.eq.s32.totalorder %s21, 1
      %p65 = por %p63, %p64
      %p67 = scmp.ne.s32.totalorder %s52, %s66
      %p68 = scmp.eq.s32.totalorder %s21, 0
      %p69 = por %p67, %p68
      %s71 = sadd.s32 %s70, 1
      %p74 = scmp.eq.s32.totalorder %s15, 1
      %p75 = scmp.ne.s32.totalorder %s70, %s72
      %p76 = scmp.eq.s32.totalorder %s15, 0
      %p77 = por %p75, %p76
      %p78 = scmp.ne.s32.totalorder %s70, %s72
      %p79 = scmp.eq.s32.totalorder %s20, 1
      %p80 = por %p78, %p79
      %p81 = scmp.ne.s32.totalorder %s72, %s73
      %p82 = scmp.eq.s32.totalorder %s20, 0
      %p83 = por %p81, %p82
      %p84 = scmp.ne.s32.totalorder %s72, %s73
      %p85 = scmp.eq.s32.totalorder %s21, 1
      %p86 = por %p84, %p85
      %p88 = scmp.ne.s32.totalorder %s73, %s87
      %p89 = scmp.eq.s32.totalorder %s21, 0
      %p90 = por %p88, %p89
      %s92 = sadd.s32 %s91, 1
      %p95 = scmp.eq.s32.totalorder %s15, 1
      %p96 = scmp.ne.s32.totalorder %s91, %s93
      %p97 = scmp.eq.s32.totalorder %s15, 0
      %p98 = por %p96, %p97
      %p99 = scmp.ne.s32.totalorder %s91, %s93
      %p100 = scmp.eq.s32.totalorder %s20, 1
      %p101 = por %p99, %p100
      %p102 = scmp.ne.s32.totalorder %s93, %s94
      %p103 = scmp.eq.s32.totalorder %s20, 0
      %p104 = por %p102, %p103
      %p105 = scmp.ne.s32.totalorder %s93, %s94
      %p106 = scmp.eq.s32.totalorder %s21, 1
      %p107 = por %p105, %p106
      %p109 = scmp.ne.s32.totalorder %s94, %s108
      %p110 = scmp.eq.s32.totalorder %s21, 0
      %p111 = por %p109, %p110
      %s113 = sadd.s32 %s112, 1
      %p116 = scmp.eq.s32.totalorder %s15, 1
      %p117 = scmp.ne.s32.totalorder %s112, %s114
      %p118 = scmp.eq.s32.totalorder %s15, 0
      %p119 = por %p117, %p118
      %p120 = scmp.ne.s32.totalorder %s112, %s114
      %p121 = scmp.eq.s32.totalorder %s20, 1
      %p122 = por %p120, %p121
      %p123 = scmp.ne.s32.totalorder %s114, %s115
      %p124 = scmp.eq.s32.totalorder %s20, 0
      %p125 = por %p123, %p124
      %p126 = scmp.ne.s32.totalorder %s114, %s115
      %p127 = scmp.eq.s32.totalorder %s21, 1
      %p128 = por %p126, %p127
      %p130 = scmp.ne.s32.totalorder %s115, %s129
      %p131 = scmp.eq.s32.totalorder %s21, 0
      %p132 = por %p130, %p131
      %s134 = sadd.s32 %s133, 1
      %p137 = scmp.eq.s32.totalorder %s15, 1
      %p138 = scmp.ne.s32.totalorder %s133, %s135
      %p139 = scmp.eq.s32.totalorder %s15, 0
      %p140 = por %p138, %p139
      %p141 = scmp.ne.s32.totalorder %s133, %s135
      %p142 = scmp.eq.s32.totalorder %s20, 1
      %p143 = por %p141, %p142
      %p144 = scmp.ne.s32.totalorder %s135, %s136
      %p145 = scmp.eq.s32.totalorder %s20, 0
      %p146 = por %p144, %p145
      %p147 = scmp.ne.s32.totalorder %s135, %s136
      %p148 = scmp.eq.s32.totalorder %s21, 1
      %p149 = por %p147, %p148
      %p151 = scmp.ne.s32.totalorder %s136, %s150
      %p152 = scmp.eq.s32.totalorder %s21, 0
      %p153 = por %p151, %p152
      %s154 = ssub.s32 %s15, %s22
      %p155 = scmp.eq.s32.totalorder %s154, 0
      %s157 = sadd.s32 %s156, 1
      %s158 = scalar_select %p155, %s156, %s157
      %p161 = pneg %p155
      %p162 = scmp.eq.s32.totalorder %s15, 1
      %p163 = por %p161, %p162
      %p164 = scmp.ne.s32.totalorder %s156, %s159
      %p165 = scmp.eq.s32.totalorder %s15, 0
      %p166 = por %p164, %p165
      %p167 = scmp.ne.s32.totalorder %s156, %s159
      %p168 = scmp.eq.s32.totalorder %s20, 1
      %p169 = por %p167, %p168
      %p170 = scmp.ne.s32.totalorder %s159, %s160
      %p171 = scmp.eq.s32.totalorder %s20, 0
      %p172 = por %p170, %p171
      %p173 = scmp.ne.s32.totalorder %s159, %s160
      %p174 = scmp.eq.s32.totalorder %s21, 1
      %p175 = por %p173, %p174
      %p177 = scmp.ne.s32.totalorder %s160, %s176
      %p178 = scmp.eq.s32.totalorder %s21, 0
      %p179 = por %p177, %p178
      %p180 = scmp.le.s32.totalorder 1, %s15
      %p181 = scmp.lt.s32.totalorder %s15, 3
      %p182 = pnand %p180, %p181
      %p183 = pneg %p182
      // Predicated region
      $region9: #{attation_cov_forward.2} parent=5 // pred_check
        _
      $region10: #{attation_cov_forward.2} parent=5 // pred_check_branch
        %185 = sbr.rel (%p182) target = $region12
      $region11: #{attation_cov_forward.2} parent=5 // pred_region
        %s186 = ssub.s32 %s15, 1
        // Predicated region
        $region13: #{attation_cov_forward.2} parent=11 // pred_check
          %p187 = pneg %p62
        $region14: #{attation_cov_forward.2} parent=11 // pred_check_branch
          %189 = sbr.rel (%p187) target = $region16
        $region15: #{attation_cov_forward.2} parent=11 // pred_region
          _
        $region16: #{attation_cov_forward.2} parent=11 // pred_fallthru
          _
        // Predicated region
        $region17: #{attation_cov_forward.2} parent=11 // pred_check
          %p190 = pneg %p83
        $region18: #{attation_cov_forward.2} parent=11 // pred_check_branch
          %192 = sbr.rel (%p190) target = $region20
        $region19: #{attation_cov_forward.2} parent=11 // pred_region
          %194 = vsyncadd [#allocation3], 0
          %s195 = sshll.u32 %s2, 4
          %s196 = int_to_ptr.hbm [resolvable:$true] %s195
          %s197 = sshll.u32 [#allocation2], 4
          %s198 = int_to_ptr.vmem [resolvable:$true] %s197
          %203 = dma.hbm_to_vmem [thread:$0]  %s196, 1024, %s198, [#allocation3], 128, 128, 8
        $region20: #{attation_cov_forward.2} parent=11 // pred_fallthru
          _
        // Predicated region
        $region21: #{attation_cov_forward.2} parent=11 // pred_check
          %p204 = pneg %p104
        $region22: #{attation_cov_forward.2} parent=11 // pred_check_branch
          %206 = sbr.rel (%p204) target = $region24
        $region23: #{attation_cov_forward.2} parent=11 // pred_region
          %208 = vsyncadd [#allocation5], 0
          %s209 = sshll.u32 %s3, 4
          %s210 = int_to_ptr.hbm [resolvable:$true] %s209
          %s211 = sshll.u32 [#allocation4], 4
          %s212 = int_to_ptr.vmem [resolvable:$true] %s211
          %217 = dma.hbm_to_vmem [thread:$0]  %s210, 32, %s212, [#allocation5], 16, 16, 1
        $region24: #{attation_cov_forward.2} parent=11 // pred_fallthru
          _
        // Predicated region
        $region25: #{attation_cov_forward.2} parent=11 // pred_check
          %p218 = pneg %p125
        $region26: #{attation_cov_forward.2} parent=11 // pred_check_branch
          %220 = sbr.rel (%p218) target = $region28
        $region27: #{attation_cov_forward.2} parent=11 // pred_region
          %222 = vsyncadd [#allocation5], 0
          %s223 = sshll.u32 %s4, 4
          %s224 = int_to_ptr.hbm [resolvable:$true] %s223
          %s225 = sshll.u32 [#allocation6], 4
          %s226 = int_to_ptr.vmem [resolvable:$true] %s225
          %231 = dma.hbm_to_vmem [thread:$0]  %s224, 1024, %s226, [#allocation5], 128, 128, 8
        $region28: #{attation_cov_forward.2} parent=11 // pred_fallthru
          _
        // Predicated region
        $region29: #{attation_cov_forward.2} parent=11 // pred_check
          %p232 = pneg %p146
        $region30: #{attation_cov_forward.2} parent=11 // pred_check_branch
          %234 = sbr.rel (%p232) target = $region32
        $region31: #{attation_cov_forward.2} parent=11 // pred_region
          %236 = vsyncadd [#allocation8], 0
          %s237 = sshll.u32 %s5, 4
          %s238 = int_to_ptr.hbm [resolvable:$true] %s237
          %s239 = sshll.u32 [#allocation7], 4
          %s240 = int_to_ptr.vmem [resolvable:$true] %s239
          %245 = dma.hbm_to_vmem [thread:$0]  %s238, 32, %s240, [#allocation8], 16, 16, 1
        $region32: #{attation_cov_forward.2} parent=11 // pred_fallthru
          _
      $region12: #{attation_cov_forward.2} parent=5 // pred_fallthru
        _
      %p246 = scmp.lt.s32.totalorder %s15, 2
      // Predicated region
      $region33: #{attation_cov_forward.2} parent=5 // pred_check
        %p247 = pneg %p246
      $region34: #{attation_cov_forward.2} parent=5 // pred_check_branch
        %249 = sbr.rel (%p247) target = $region36
      $region35: #{attation_cov_forward.2} parent=5 // pred_region
        // Predicated region
        $region37: #{attation_cov_forward.2} parent=35 // pred_check
          %p250 = pneg %p35
        $region38: #{attation_cov_forward.2} parent=35 // pred_check_branch
          %252 = sbr.rel (%p250) target = $region40
        $region39: #{attation_cov_forward.2} parent=35 // pred_region
          %p253 = scmp.lt.s32.totalorder %s15, 1
          %s254 = scalar_select %p253, %s15, 1
          %s255 = smul.addr %s254, 8
          %s256 = scalar_lea.vmem %s0, %s255
        $region40: #{attation_cov_forward.2} parent=35 // pred_fallthru
          _
      $region36: #{attation_cov_forward.2} parent=5 // pred_fallthru
        _
      %p257 = scmp.le.s32.totalorder 1, %s15
      %p258 = scmp.lt.s32.totalorder %s15, 3
      %p259 = pnand %p257, %p258
      %p260 = pneg %p259
      // Predicated region
      $region41: #{attation_cov_forward.2} parent=5 // pred_check
        _
      $region42: #{attation_cov_forward.2} parent=5 // pred_check_branch
        %262 = sbr.rel (%p259) target = $region44
      $region43: #{attation_cov_forward.2} parent=5 // pred_region
        %s263 = ssub.s32 %s15, 1
        // Predicated region
        $region45: #{attation_cov_forward.2} parent=43 // pred_check
          %p264 = pneg %p83
        $region46: #{attation_cov_forward.2} parent=43 // pred_check_branch
          %266 = sbr.rel (%p264) target = $region48
        $region47: #{attation_cov_forward.2} parent=43 // pred_region
          %268 = dma.done [#allocation3], 1024
        $region48: #{attation_cov_forward.2} parent=43 // pred_fallthru
          _
        // Predicated region
        $region49: #{attation_cov_forward.2} parent=43 // pred_check
          %p269 = pneg %p104
        $region50: #{attation_cov_forward.2} parent=43 // pred_check_branch
          %271 = sbr.rel (%p269) target = $region52
        $region51: #{attation_cov_forward.2} parent=43 // pred_region
          %273 = dma.done [#allocation5], 32
        $region52: #{attation_cov_forward.2} parent=43 // pred_fallthru
          _
        // Predicated region
        $region53: #{attation_cov_forward.2} parent=43 // pred_check
          %p274 = pneg %p125
        $region54: #{attation_cov_forward.2} parent=43 // pred_check_branch
          %276 = sbr.rel (%p274) target = $region56
        $region55: #{attation_cov_forward.2} parent=43 // pred_region
          %278 = dma.done [#allocation5], 1024
        $region56: #{attation_cov_forward.2} parent=43 // pred_fallthru
          _
        // Predicated region
        $region57: #{attation_cov_forward.2} parent=43 // pred_check
          %p279 = pneg %p146
        $region58: #{attation_cov_forward.2} parent=43 // pred_check_branch
          %281 = sbr.rel (%p279) target = $region60
        $region59: #{attation_cov_forward.2} parent=43 // pred_region
          %283 = dma.done [#allocation8], 32
        $region60: #{attation_cov_forward.2} parent=43 // pred_fallthru
          _
        %p284 = scmp.lt.s32.totalorder %s20, 1
        %s285 = scalar_select %p284, %s20, 1
        %s286 = smul.addr %s285, 8
        %s287 = scalar_lea.vmem %s0, %s286
        %p288 = pneg %p41
        %p289 = pneg %p38
        %p290 = pneg %p62
        %p291 = pneg %p59
        %p292 = pneg %p83
        %p293 = pneg %p80
        %p294 = pneg %p104
        %p295 = pneg %p101
        %p296 = pneg %p125
        %p297 = pneg %p122
        %p298 = pneg %p146
        %p299 = pneg %p143
        %p300 = pneg %p172
        %p301 = pneg %p169
        %p302 = scmp.lt.s32.totalorder %s20, 1
        %s303 = scalar_select %p302, %s20, 1
        %s304 = smul.addr %s303, 8
        %s305 = scalar_lea.vmem %s6, %s304
        %p306 = scmp.lt.s32.totalorder %s20, 1
        %s307 = scalar_select %p306, %s20, 1
        %s308 = smul.addr %s307, 8
        %s309 = scalar_lea.vmem %s0, %s308
        %p310 = scmp.lt.s32.totalorder %s20, 1
        %s311 = scalar_select %p310, %s20, 1
        %s312 = smul.addr %s311, 8
        %s313 = scalar_lea.vmem %s6, %s312
        %v314 = vld [vmem:[%s1] sm:$0xff]
        %v315 = vld [vmem:[%s309] sm:$0xff]
        %v316 = vld [vmem:[#allocation2] sm:$0xff]
        %v317 = vld [vmem:[#allocation2 + $0x8] sm:$0xff]
        %v318 = vld [vmem:[#allocation2 + $0x10] sm:$0xff]
        %v319 = vld [vmem:[#allocation2 + $0x18] sm:$0xff]
        %v320 = vld [vmem:[#allocation4] sm:$0x1]
        %v321 = vld [vmem:[#allocation6] sm:$0xff]
        %v322 = vld [vmem:[#allocation6 + $0x8] sm:$0xff]
        %v323 = vld [vmem:[#allocation6 + $0x10] sm:$0xff]
        %v324 = vld [vmem:[#allocation6 + $0x18] sm:$0xff]
        %v325 = vld [vmem:[#allocation7] sm:$0x1]
        %v327 = vperm.slane %v320, 0
        %vm329 = vcmask 261120
        %v331 = vsel %vm329, %v315, 0
        %333 = vmatpush.msra.mxu0 0.0
        %334 = vmatpush.msra.mxu0 0.0
        %335 = vmatpush.msra.mxu0 0.0
        %336 = vmatpush.msra.mxu0 0.0
        %337 = vmatpush.msra.mxu0 0.0
        %338 = vmatpush.msra.mxu0 0.0
        %339 = vmatpush.msra.mxu0 0.0
        %340 = vmatpush.msra.mxu0 0.0
        %341 = vmatpush.msra.mxu0 0.0
        %342 = vmatpush.msra.mxu0 0.0
        %343 = vmatpush.msra.mxu0 0.0
        %344 = vmatpush.msra.mxu0 0.0
        %345 = vmatpush.msra.mxu0 %v319
        %346 = vmatpush.msra.mxu0 %v318
        %347 = vmatpush.msra.mxu0 %v317
        %348 = vmatpush.msra.mxu0 %v316
        %349 = vmatmul.f32.gmra.mxu0 %v331
        %v350 = vpop.f32.mrf.mxu0
        %v351 = vadd.f32 %v327, %v350
        %352 = vdwg.mxu0
        %354 = vrot.lane.b32.xlu0 %v351, 96
        %v355 = vpop.permute.xlu0 %354
        %vm356 = vcmask 31744
        %v357 = vsel %vm356, %v351, 0
        %v359 = vsel %vm356, %v355, 0
        %361 = vmatpush.xpose.msra.mxu0 0.0
        %362 = vmatpush.xpose.msra.mxu0 0.0
        %363 = vmatpush.xpose.msra.mxu0 0.0
        %364 = vmatpush.xpose.msra.mxu0 0.0
        %365 = vmatpush.xpose.msra.mxu0 0.0
        %366 = vmatpush.xpose.msra.mxu0 0.0
        %367 = vmatpush.xpose.msra.mxu0 0.0
        %368 = vmatpush.xpose.msra.mxu0 0.0
        %369 = vmatpush.xpose.msra.mxu0 0.0
        %370 = vmatpush.xpose.msra.mxu0 0.0
        %371 = vmatpush.xpose.msra.mxu0 0.0
        %372 = vmatpush.xpose.msra.mxu0 0.0
        %373 = vmatpush.xpose.msra.mxu0 0.0
        %374 = vmatpush.xpose.msra.mxu0 0.0
        %375 = vmatpush.xpose.msra.mxu0 0.0
        %376 = vmatpush.xpose.msra.mxu0 %v359
        %377 = vmatmul.f32.gmra.mxu0 %v357
        %v378 = vpop.f32.mrf.mxu0
        %v379 = vadd.f32 0.0, %v378
        %380 = vdwg.mxu0
        %v381 = vmul.f32 %v379, 0.5
        %v382 = vadd.f32 %v381, %v314
        %vm383 = vcmask 64512
        %v384 = vsel %vm383, %v382, -inf
        %385 = vmax.xlane.f32.xlu0 %v384
        %v386 = vpop.xlane.xlu0 %385
        %v387 = vsub.f32 %v382, %v386
        %v388 = vmul.f32 %v387, 1.442695
        %v389 = vpow.pop %v388
        %v390 = vsel %vm383, %v389, 0.0
        %391 = vadd.xlane.f32.xlu0 %v390
        %v392 = vpop.xlane.xlu0 %391
        %v393 = vrcp.pop %v392
        %v394 = vmul.f32 %v389, %v393
        %395 = vrot.lane.b32.xlu0 %v351, 64
        %v396 = vpop.permute.xlu0 %395
        %v399 = vsel %vm383, %v394, 0
        %401 = vmatpush.msra.mxu0 0.0
        %402 = vmatpush.msra.mxu0 0.0
        %403 = vmatpush.msra.mxu0 0.0
        %404 = vmatpush.msra.mxu0 0.0
        %405 = vmatpush.msra.mxu0 0.0
        %406 = vmatpush.msra.mxu0 0.0
        %407 = vmatpush.msra.mxu0 0.0
        %408 = vmatpush.msra.mxu0 0.0
        %409 = vmatpush.msra.mxu0 0.0
        %410 = vmatpush.msra.mxu0 0.0
        %411 = vmatpush.msra.mxu0 0.0
        %412 = vmatpush.msra.mxu0 0.0
        %413 = vmatpush.msra.mxu0 0.0
        %414 = vmatpush.msra.mxu0 0.0
        %415 = vmatpush.msra.mxu0 0.0
        %416 = vmatpush.msra.mxu0 %v396
        %417 = vmatmul.f32.gmra.mxu0 %v399
        %v418 = vpop.f32.mrf.mxu0
        %v419 = vadd.f32 0.0, %v418
        %420 = vdwg.mxu0
        %421 = vrot.lane.b32.xlu0 %v351, 124
        %v422 = vpop.permute.xlu0 %421
        %423 = vrot.lane.b32.xlu0 %v351, 92
        %v424 = vpop.permute.xlu0 %423
        %v425 = vsel %vm356, %v422, 0
        %v427 = vsel %vm356, %v424, 0
        %429 = vmatpush.xpose.msra.mxu0 0.0
        %430 = vmatpush.xpose.msra.mxu0 0.0
        %431 = vmatpush.xpose.msra.mxu0 0.0
        %432 = vmatpush.xpose.msra.mxu0 0.0
        %433 = vmatpush.xpose.msra.mxu0 0.0
        %434 = vmatpush.xpose.msra.mxu0 0.0
        %435 = vmatpush.xpose.msra.mxu0 0.0
        %436 = vmatpush.xpose.msra.mxu0 0.0
        %437 = vmatpush.xpose.msra.mxu0 0.0
        %438 = vmatpush.xpose.msra.mxu0 0.0
        %439 = vmatpush.xpose.msra.mxu0 0.0
        %440 = vmatpush.xpose.msra.mxu0 0.0
        %441 = vmatpush.xpose.msra.mxu0 0.0
        %442 = vmatpush.xpose.msra.mxu0 0.0
        %443 = vmatpush.xpose.msra.mxu0 0.0
        %444 = vmatpush.xpose.msra.mxu0 %v427
        %445 = vmatmul.f32.gmra.mxu0 %v425
        %v446 = vpop.f32.mrf.mxu0
        %v447 = vadd.f32 0.0, %v446
        %448 = vdwg.mxu0
        %v449 = vmul.f32 %v447, 0.5
        %v450 = vadd.f32 %v449, %v314
        %v451 = vsel %vm383, %v450, -inf
        %452 = vmax.xlane.f32.xlu0 %v451
        %v453 = vpop.xlane.xlu0 %452
        %v454 = vsub.f32 %v450, %v453
        %v455 = vmul.f32 %v454, 1.442695
        %v456 = vpow.pop %v455
        %v457 = vsel %vm383, %v456, 0.0
        %458 = vadd.xlane.f32.xlu0 %v457
        %v459 = vpop.xlane.xlu0 %458
        %v460 = vrcp.pop %v459
        %v461 = vmul.f32 %v456, %v460
        %462 = vrot.lane.b32.xlu0 %v351, 60
        %v463 = vpop.permute.xlu0 %462
        %v466 = vsel %vm383, %v461, 0
        %468 = vmatpush.msra.mxu0 0.0
        %469 = vmatpush.msra.mxu0 0.0
        %470 = vmatpush.msra.mxu0 0.0
        %471 = vmatpush.msra.mxu0 0.0
        %472 = vmatpush.msra.mxu0 0.0
        %473 = vmatpush.msra.mxu0 0.0
        %474 = vmatpush.msra.mxu0 0.0
        %475 = vmatpush.msra.mxu0 0.0
        %476 = vmatpush.msra.mxu0 0.0
        %477 = vmatpush.msra.mxu0 0.0
        %478 = vmatpush.msra.mxu0 0.0
        %479 = vmatpush.msra.mxu0 0.0
        %480 = vmatpush.msra.mxu0 0.0
        %481 = vmatpush.msra.mxu0 0.0
        %482 = vmatpush.msra.mxu0 0.0
        %483 = vmatpush.msra.mxu0 %v463
        %484 = vmatmul.f32.gmra.mxu0 %v466
        %v485 = vpop.f32.mrf.mxu0
        %v486 = vadd.f32 0.0, %v485
        %487 = vdwg.mxu0
        %488 = vrot.lane.b32.xlu0 %v351, 120
        %v489 = vpop.permute.xlu0 %488
        %490 = vrot.lane.b32.xlu0 %v351, 88
        %v491 = vpop.permute.xlu0 %490
        %v492 = vsel %vm356, %v489, 0
        %v494 = vsel %vm356, %v491, 0
        %496 = vmatpush.xpose.msra.mxu0 0.0
        %497 = vmatpush.xpose.msra.mxu0 0.0
        %498 = vmatpush.xpose.msra.mxu0 0.0
        %499 = vmatpush.xpose.msra.mxu0 0.0
        %500 = vmatpush.xpose.msra.mxu0 0.0
        %501 = vmatpush.xpose.msra.mxu0 0.0
        %502 = vmatpush.xpose.msra.mxu0 0.0
        %503 = vmatpush.xpose.msra.mxu0 0.0
        %504 = vmatpush.xpose.msra.mxu0 0.0
        %505 = vmatpush.xpose.msra.mxu0 0.0
        %506 = vmatpush.xpose.msra.mxu0 0.0
        %507 = vmatpush.xpose.msra.mxu0 0.0
        %508 = vmatpush.xpose.msra.mxu0 0.0
        %509 = vmatpush.xpose.msra.mxu0 0.0
        %510 = vmatpush.xpose.msra.mxu0 0.0
        %511 = vmatpush.xpose.msra.mxu0 %v494
        %512 = vmatmul.f32.gmra.mxu0 %v492
        %v513 = vpop.f32.mrf.mxu0
        %v514 = vadd.f32 0.0, %v513
        %515 = vdwg.mxu0
        %v516 = vmul.f32 %v514, 0.5
        %v517 = vadd.f32 %v516, %v314
        %v518 = vsel %vm383, %v517, -inf
        %519 = vmax.xlane.f32.xlu0 %v518
        %v520 = vpop.xlane.xlu0 %519
        %v521 = vsub.f32 %v517, %v520
        %v522 = vmul.f32 %v521, 1.442695
        %v523 = vpow.pop %v522
        %v524 = vsel %vm383, %v523, 0.0
        %525 = vadd.xlane.f32.xlu0 %v524
        %v526 = vpop.xlane.xlu0 %525
        %v527 = vrcp.pop %v526
        %v528 = vmul.f32 %v523, %v527
        %529 = vrot.lane.b32.xlu0 %v351, 56
        %v530 = vpop.permute.xlu0 %529
        %v533 = vsel %vm383, %v528, 0
        %535 = vmatpush.msra.mxu0 0.0
        %536 = vmatpush.msra.mxu0 0.0
        %537 = vmatpush.msra.mxu0 0.0
        %538 = vmatpush.msra.mxu0 0.0
        %539 = vmatpush.msra.mxu0 0.0
        %540 = vmatpush.msra.mxu0 0.0
        %541 = vmatpush.msra.mxu0 0.0
        %542 = vmatpush.msra.mxu0 0.0
        %543 = vmatpush.msra.mxu0 0.0
        %544 = vmatpush.msra.mxu0 0.0
        %545 = vmatpush.msra.mxu0 0.0
        %546 = vmatpush.msra.mxu0 0.0
        %547 = vmatpush.msra.mxu0 0.0
        %548 = vmatpush.msra.mxu0 0.0
        %549 = vmatpush.msra.mxu0 0.0
        %550 = vmatpush.msra.mxu0 %v530
        %551 = vmatmul.f32.gmra.mxu0 %v533
        %v552 = vpop.f32.mrf.mxu0
        %v553 = vadd.f32 0.0, %v552
        %554 = vdwg.mxu0
        %555 = vrot.lane.b32.xlu0 %v351, 116
        %v556 = vpop.permute.xlu0 %555
        %557 = vrot.lane.b32.xlu0 %v351, 84
        %v558 = vpop.permute.xlu0 %557
        %v559 = vsel %vm356, %v556, 0
        %v561 = vsel %vm356, %v558, 0
        %563 = vmatpush.xpose.msra.mxu0 0.0
        %564 = vmatpush.xpose.msra.mxu0 0.0
        %565 = vmatpush.xpose.msra.mxu0 0.0
        %566 = vmatpush.xpose.msra.mxu0 0.0
        %567 = vmatpush.xpose.msra.mxu0 0.0
        %568 = vmatpush.xpose.msra.mxu0 0.0
        %569 = vmatpush.xpose.msra.mxu0 0.0
        %570 = vmatpush.xpose.msra.mxu0 0.0
        %571 = vmatpush.xpose.msra.mxu0 0.0
        %572 = vmatpush.xpose.msra.mxu0 0.0
        %573 = vmatpush.xpose.msra.mxu0 0.0
        %574 = vmatpush.xpose.msra.mxu0 0.0
        %575 = vmatpush.xpose.msra.mxu0 0.0
        %576 = vmatpush.xpose.msra.mxu0 0.0
        %577 = vmatpush.xpose.msra.mxu0 0.0
        %578 = vmatpush.xpose.msra.mxu0 %v561
        %579 = vmatmul.f32.gmra.mxu0 %v559
        %v580 = vpop.f32.mrf.mxu0
        %v581 = vadd.f32 0.0, %v580
        %582 = vdwg.mxu0
        %v583 = vmul.f32 %v581, 0.5
        %v584 = vadd.f32 %v583, %v314
        %v585 = vsel %vm383, %v584, -inf
        %586 = vmax.xlane.f32.xlu0 %v585
        %v587 = vpop.xlane.xlu0 %586
        %v588 = vsub.f32 %v584, %v587
        %v589 = vmul.f32 %v588, 1.442695
        %v590 = vpow.pop %v589
        %v591 = vsel %vm383, %v590, 0.0
        %592 = vadd.xlane.f32.xlu0 %v591
        %v593 = vpop.xlane.xlu0 %592
        %v594 = vrcp.pop %v593
        %v595 = vmul.f32 %v590, %v594
        %596 = vrot.lane.b32.xlu0 %v351, 52
        %v597 = vpop.permute.xlu0 %596
        %v600 = vsel %vm383, %v595, 0
        %602 = vmatpush.msra.mxu0 0.0
        %603 = vmatpush.msra.mxu0 0.0
        %604 = vmatpush.msra.mxu0 0.0
        %605 = vmatpush.msra.mxu0 0.0
        %606 = vmatpush.msra.mxu0 0.0
        %607 = vmatpush.msra.mxu0 0.0
        %608 = vmatpush.msra.mxu0 0.0
        %609 = vmatpush.msra.mxu0 0.0
        %610 = vmatpush.msra.mxu0 0.0
        %611 = vmatpush.msra.mxu0 0.0
        %612 = vmatpush.msra.mxu0 0.0
        %613 = vmatpush.msra.mxu0 0.0
        %614 = vmatpush.msra.mxu0 0.0
        %615 = vmatpush.msra.mxu0 0.0
        %616 = vmatpush.msra.mxu0 0.0
        %617 = vmatpush.msra.mxu0 %v597
        %618 = vmatmul.f32.gmra.mxu0 %v600
        %v619 = vpop.f32.mrf.mxu0
        %v620 = vadd.f32 0.0, %v619
        %621 = vdwg.mxu0
        %622 = vrot.lane.b32.xlu0 %v351, 112
        %v623 = vpop.permute.xlu0 %622
        %624 = vrot.lane.b32.xlu0 %v351, 80
        %v625 = vpop.permute.xlu0 %624
        %v626 = vsel %vm356, %v623, 0
        %v628 = vsel %vm356, %v625, 0
        %630 = vmatpush.xpose.msra.mxu0 0.0
        %631 = vmatpush.xpose.msra.mxu0 0.0
        %632 = vmatpush.xpose.msra.mxu0 0.0
        %633 = vmatpush.xpose.msra.mxu0 0.0
        %634 = vmatpush.xpose.msra.mxu0 0.0
        %635 = vmatpush.xpose.msra.mxu0 0.0
        %636 = vmatpush.xpose.msra.mxu0 0.0
        %637 = vmatpush.xpose.msra.mxu0 0.0
        %638 = vmatpush.xpose.msra.mxu0 0.0
        %639 = vmatpush.xpose.msra.mxu0 0.0
        %640 = vmatpush.xpose.msra.mxu0 0.0
        %641 = vmatpush.xpose.msra.mxu0 0.0
        %642 = vmatpush.xpose.msra.mxu0 0.0
        %643 = vmatpush.xpose.msra.mxu0 0.0
        %644 = vmatpush.xpose.msra.mxu0 0.0
        %645 = vmatpush.xpose.msra.mxu0 %v628
        %646 = vmatmul.f32.gmra.mxu0 %v626
        %v647 = vpop.f32.mrf.mxu0
        %v648 = vadd.f32 0.0, %v647
        %649 = vdwg.mxu0
        %v650 = vmul.f32 %v648, 0.5
        %v651 = vadd.f32 %v650, %v314
        %v652 = vsel %vm383, %v651, -inf
        %653 = vmax.xlane.f32.xlu0 %v652
        %v654 = vpop.xlane.xlu0 %653
        %v655 = vsub.f32 %v651, %v654
        %v656 = vmul.f32 %v655, 1.442695
        %v657 = vpow.pop %v656
        %v658 = vsel %vm383, %v657, 0.0
        %659 = vadd.xlane.f32.xlu0 %v658
        %v660 = vpop.xlane.xlu0 %659
        %v661 = vrcp.pop %v660
        %v662 = vmul.f32 %v657, %v661
        %663 = vrot.lane.b32.xlu0 %v351, 48
        %v664 = vpop.permute.xlu0 %663
        %v667 = vsel %vm383, %v662, 0
        %669 = vmatpush.msra.mxu0 0.0
        %670 = vmatpush.msra.mxu0 0.0
        %671 = vmatpush.msra.mxu0 0.0
        %672 = vmatpush.msra.mxu0 0.0
        %673 = vmatpush.msra.mxu0 0.0
        %674 = vmatpush.msra.mxu0 0.0
        %675 = vmatpush.msra.mxu0 0.0
        %676 = vmatpush.msra.mxu0 0.0
        %677 = vmatpush.msra.mxu0 0.0
        %678 = vmatpush.msra.mxu0 0.0
        %679 = vmatpush.msra.mxu0 0.0
        %680 = vmatpush.msra.mxu0 0.0
        %681 = vmatpush.msra.mxu0 0.0
        %682 = vmatpush.msra.mxu0 0.0
        %683 = vmatpush.msra.mxu0 0.0
        %684 = vmatpush.msra.mxu0 %v664
        %685 = vmatmul.f32.gmra.mxu0 %v667
        %v686 = vpop.f32.mrf.mxu0
        %v687 = vadd.f32 0.0, %v686
        %688 = vdwg.mxu0
        %689 = vrot.lane.b32.xlu0 %v351, 108
        %v690 = vpop.permute.xlu0 %689
        %691 = vrot.lane.b32.xlu0 %v351, 76
        %v692 = vpop.permute.xlu0 %691
        %v693 = vsel %vm356, %v690, 0
        %v695 = vsel %vm356, %v692, 0
        %697 = vmatpush.xpose.msra.mxu0 0.0
        %698 = vmatpush.xpose.msra.mxu0 0.0
        %699 = vmatpush.xpose.msra.mxu0 0.0
        %700 = vmatpush.xpose.msra.mxu0 0.0
        %701 = vmatpush.xpose.msra.mxu0 0.0
        %702 = vmatpush.xpose.msra.mxu0 0.0
        %703 = vmatpush.xpose.msra.mxu0 0.0
        %704 = vmatpush.xpose.msra.mxu0 0.0
        %705 = vmatpush.xpose.msra.mxu0 0.0
        %706 = vmatpush.xpose.msra.mxu0 0.0
        %707 = vmatpush.xpose.msra.mxu0 0.0
        %708 = vmatpush.xpose.msra.mxu0 0.0
        %709 = vmatpush.xpose.msra.mxu0 0.0
        %710 = vmatpush.xpose.msra.mxu0 0.0
        %711 = vmatpush.xpose.msra.mxu0 0.0
        %712 = vmatpush.xpose.msra.mxu0 %v695
        %713 = vmatmul.f32.gmra.mxu0 %v693
        %v714 = vpop.f32.mrf.mxu0
        %v715 = vadd.f32 0.0, %v714
        %716 = vdwg.mxu0
        %v717 = vmul.f32 %v715, 0.5
        %v718 = vadd.f32 %v717, %v314
        %v719 = vsel %vm383, %v718, -inf
        %720 = vmax.xlane.f32.xlu0 %v719
        %v721 = vpop.xlane.xlu0 %720
        %v722 = vsub.f32 %v718, %v721
        %v723 = vmul.f32 %v722, 1.442695
        %v724 = vpow.pop %v723
        %v725 = vsel %vm383, %v724, 0.0
        %726 = vadd.xlane.f32.xlu0 %v725
        %v727 = vpop.xlane.xlu0 %726
        %v728 = vrcp.pop %v727
        %v729 = vmul.f32 %v724, %v728
        %730 = vrot.lane.b32.xlu0 %v351, 44
        %v731 = vpop.permute.xlu0 %730
        %v734 = vsel %vm383, %v729, 0
        %736 = vmatpush.msra.mxu0 0.0
        %737 = vmatpush.msra.mxu0 0.0
        %738 = vmatpush.msra.mxu0 0.0
        %739 = vmatpush.msra.mxu0 0.0
        %740 = vmatpush.msra.mxu0 0.0
        %741 = vmatpush.msra.mxu0 0.0
        %742 = vmatpush.msra.mxu0 0.0
        %743 = vmatpush.msra.mxu0 0.0
        %744 = vmatpush.msra.mxu0 0.0
        %745 = vmatpush.msra.mxu0 0.0
        %746 = vmatpush.msra.mxu0 0.0
        %747 = vmatpush.msra.mxu0 0.0
        %748 = vmatpush.msra.mxu0 0.0
        %749 = vmatpush.msra.mxu0 0.0
        %750 = vmatpush.msra.mxu0 0.0
        %751 = vmatpush.msra.mxu0 %v731
        %752 = vmatmul.f32.gmra.mxu0 %v734
        %v753 = vpop.f32.mrf.mxu0
        %v754 = vadd.f32 0.0, %v753
        %755 = vdwg.mxu0
        %756 = vrot.lane.b32.xlu0 %v351, 104
        %v757 = vpop.permute.xlu0 %756
        %758 = vrot.lane.b32.xlu0 %v351, 72
        %v759 = vpop.permute.xlu0 %758
        %v760 = vsel %vm356, %v757, 0
        %v762 = vsel %vm356, %v759, 0
        %764 = vmatpush.xpose.msra.mxu0 0.0
        %765 = vmatpush.xpose.msra.mxu0 0.0
        %766 = vmatpush.xpose.msra.mxu0 0.0
        %767 = vmatpush.xpose.msra.mxu0 0.0
        %768 = vmatpush.xpose.msra.mxu0 0.0
        %769 = vmatpush.xpose.msra.mxu0 0.0
        %770 = vmatpush.xpose.msra.mxu0 0.0
        %771 = vmatpush.xpose.msra.mxu0 0.0
        %772 = vmatpush.xpose.msra.mxu0 0.0
        %773 = vmatpush.xpose.msra.mxu0 0.0
        %774 = vmatpush.xpose.msra.mxu0 0.0
        %775 = vmatpush.xpose.msra.mxu0 0.0
        %776 = vmatpush.xpose.msra.mxu0 0.0
        %777 = vmatpush.xpose.msra.mxu0 0.0
        %778 = vmatpush.xpose.msra.mxu0 0.0
        %779 = vmatpush.xpose.msra.mxu0 %v762
        %780 = vmatmul.f32.gmra.mxu0 %v760
        %v781 = vpop.f32.mrf.mxu0
        %v782 = vadd.f32 0.0, %v781
        %783 = vdwg.mxu0
        %v784 = vmul.f32 %v782, 0.5
        %v785 = vadd.f32 %v784, %v314
        %v786 = vsel %vm383, %v785, -inf
        %787 = vmax.xlane.f32.xlu0 %v786
        %v788 = vpop.xlane.xlu0 %787
        %v789 = vsub.f32 %v785, %v788
        %v790 = vmul.f32 %v789, 1.442695
        %v791 = vpow.pop %v790
        %v792 = vsel %vm383, %v791, 0.0
        %793 = vadd.xlane.f32.xlu0 %v792
        %v794 = vpop.xlane.xlu0 %793
        %v795 = vrcp.pop %v794
        %v796 = vmul.f32 %v791, %v795
        %797 = vrot.lane.b32.xlu0 %v351, 40
        %v798 = vpop.permute.xlu0 %797
        %v801 = vsel %vm383, %v796, 0
        %803 = vmatpush.msra.mxu0 0.0
        %804 = vmatpush.msra.mxu0 0.0
        %805 = vmatpush.msra.mxu0 0.0
        %806 = vmatpush.msra.mxu0 0.0
        %807 = vmatpush.msra.mxu0 0.0
        %808 = vmatpush.msra.mxu0 0.0
        %809 = vmatpush.msra.mxu0 0.0
        %810 = vmatpush.msra.mxu0 0.0
        %811 = vmatpush.msra.mxu0 0.0
        %812 = vmatpush.msra.mxu0 0.0
        %813 = vmatpush.msra.mxu0 0.0
        %814 = vmatpush.msra.mxu0 0.0
        %815 = vmatpush.msra.mxu0 0.0
        %816 = vmatpush.msra.mxu0 0.0
        %817 = vmatpush.msra.mxu0 0.0
        %818 = vmatpush.msra.mxu0 %v798
        %819 = vmatmul.f32.gmra.mxu0 %v801
        %v820 = vpop.f32.mrf.mxu0
        %v821 = vadd.f32 0.0, %v820
        %822 = vdwg.mxu0
        %823 = vrot.lane.b32.xlu0 %v351, 100
        %v824 = vpop.permute.xlu0 %823
        %825 = vrot.lane.b32.xlu0 %v351, 68
        %v826 = vpop.permute.xlu0 %825
        %v827 = vsel %vm356, %v824, 0
        %v829 = vsel %vm356, %v826, 0
        %831 = vmatpush.xpose.msra.mxu0 0.0
        %832 = vmatpush.xpose.msra.mxu0 0.0
        %833 = vmatpush.xpose.msra.mxu0 0.0
        %834 = vmatpush.xpose.msra.mxu0 0.0
        %835 = vmatpush.xpose.msra.mxu0 0.0
        %836 = vmatpush.xpose.msra.mxu0 0.0
        %837 = vmatpush.xpose.msra.mxu0 0.0
        %838 = vmatpush.xpose.msra.mxu0 0.0
        %839 = vmatpush.xpose.msra.mxu0 0.0
        %840 = vmatpush.xpose.msra.mxu0 0.0
        %841 = vmatpush.xpose.msra.mxu0 0.0
        %842 = vmatpush.xpose.msra.mxu0 0.0
        %843 = vmatpush.xpose.msra.mxu0 0.0
        %844 = vmatpush.xpose.msra.mxu0 0.0
        %845 = vmatpush.xpose.msra.mxu0 0.0
        %846 = vmatpush.xpose.msra.mxu0 %v829
        %847 = vmatmul.f32.gmra.mxu0 %v827
        %v848 = vpop.f32.mrf.mxu0
        %v849 = vadd.f32 0.0, %v848
        %850 = vdwg.mxu0
        %v851 = vmul.f32 %v849, 0.5
        %v852 = vadd.f32 %v851, %v314
        %v853 = vsel %vm383, %v852, -inf
        %854 = vmax.xlane.f32.xlu0 %v853
        %v855 = vpop.xlane.xlu0 %854
        %v856 = vsub.f32 %v852, %v855
        %v857 = vmul.f32 %v856, 1.442695
        %v858 = vpow.pop %v857
        %v859 = vsel %vm383, %v858, 0.0
        %860 = vadd.xlane.f32.xlu0 %v859
        %v861 = vpop.xlane.xlu0 %860
        %v862 = vrcp.pop %v861
        %v863 = vmul.f32 %v858, %v862
        %864 = vrot.lane.b32.xlu0 %v351, 36
        %v865 = vpop.permute.xlu0 %864
        %v868 = vsel %vm383, %v863, 0
        %870 = vmatpush.msra.mxu0 0.0
        %871 = vmatpush.msra.mxu0 0.0
        %872 = vmatpush.msra.mxu0 0.0
        %873 = vmatpush.msra.mxu0 0.0
        %874 = vmatpush.msra.mxu0 0.0
        %875 = vmatpush.msra.mxu0 0.0
        %876 = vmatpush.msra.mxu0 0.0
        %877 = vmatpush.msra.mxu0 0.0
        %878 = vmatpush.msra.mxu0 0.0
        %879 = vmatpush.msra.mxu0 0.0
        %880 = vmatpush.msra.mxu0 0.0
        %881 = vmatpush.msra.mxu0 0.0
        %882 = vmatpush.msra.mxu0 0.0
        %883 = vmatpush.msra.mxu0 0.0
        %884 = vmatpush.msra.mxu0 0.0
        %885 = vmatpush.msra.mxu0 %v865
        %886 = vmatmul.f32.gmra.mxu0 %v868
        %v887 = vpop.f32.mrf.mxu0
        %v888 = vadd.f32 0.0, %v887
        %889 = vdwg.mxu0
        %891 = vrot.lane.b32.xlu0 %v486, 4
        %v892 = vpop.permute.xlu0 %891
        %895 = vrot.lane.b32.xlu0 %v553, 8
        %v896 = vpop.permute.xlu0 %895
        %899 = vrot.lane.b32.xlu0 %v620, 12
        %v900 = vpop.permute.xlu0 %899
        %903 = vrot.lane.b32.xlu0 %v687, 16
        %v904 = vpop.permute.xlu0 %903
        %907 = vrot.lane.b32.xlu0 %v754, 20
        %v908 = vpop.permute.xlu0 %907
        %911 = vrot.lane.b32.xlu0 %v821, 24
        %v912 = vpop.permute.xlu0 %911
        %915 = vrot.lane.b32.xlu0 %v888, 28
        %v916 = vpop.permute.xlu0 %915
        %v918 = vsel %vm356, %v419, %v892
        %v919 = vsel %vm383, %v918, %v896
        %vm920 = vcmask 97280
        %v921 = vsel %vm920, %v919, %v900
        %vm922 = vcmask 130048
        %v923 = vsel %vm922, %v921, %v904
        %vm924 = vcmask 162816
        %v925 = vsel %vm924, %v923, %v908
        %vm926 = vcmask 195584
        %v927 = vsel %vm926, %v925, %v912
        %vm928 = vcmask 228352
        %v929 = vsel %vm928, %v927, %v916
        %v931 = vperm.slane %v325, 0
        %v934 = vsel %vm329, %v929, 0
        %936 = vmatpush.msra.mxu0 0.0
        %937 = vmatpush.msra.mxu0 0.0
        %938 = vmatpush.msra.mxu0 0.0
        %939 = vmatpush.msra.mxu0 0.0
        %940 = vmatpush.msra.mxu0 0.0
        %941 = vmatpush.msra.mxu0 0.0
        %942 = vmatpush.msra.mxu0 0.0
        %943 = vmatpush.msra.mxu0 0.0
        %944 = vmatpush.msra.mxu0 0.0
        %945 = vmatpush.msra.mxu0 0.0
        %946 = vmatpush.msra.mxu0 0.0
        %947 = vmatpush.msra.mxu0 0.0
        %948 = vmatpush.msra.mxu0 %v324
        %949 = vmatpush.msra.mxu0 %v323
        %950 = vmatpush.msra.mxu0 %v322
        %951 = vmatpush.msra.mxu0 %v321
        %952 = vmatmul.f32.gmra.mxu0 %v934
        %v953 = vpop.f32.mrf.mxu0
        %v954 = vadd.f32 %v931, %v953
        %955 = vdwg.mxu0
        %v956 = vadd.f32 %v954, %v315
        %s957 = scalar_lea.vmem [#allocation2], 32
        %v958 = vld [vmem:[%s957] sm:$0xff]
        %v959 = vld [vmem:[%s957 + $0x8] sm:$0xff]
        %v960 = vld [vmem:[%s957 + $0x10] sm:$0xff]
        %v961 = vld [vmem:[%s957 + $0x18] sm:$0xff]
        %s962 = scalar_lea.vmem [#allocation4], 1
        %v963 = vld [vmem:[%s962] sm:$0x1]
        %s964 = scalar_lea.vmem [#allocation6], 32
        %v965 = vld [vmem:[%s964] sm:$0xff]
        %v966 = vld [vmem:[%s964 + $0x8] sm:$0xff]
        %v967 = vld [vmem:[%s964 + $0x10] sm:$0xff]
        %v968 = vld [vmem:[%s964 + $0x18] sm:$0xff]
        %s969 = scalar_lea.vmem [#allocation7], 1
        %v970 = vld [vmem:[%s969] sm:$0x1]
        %v972 = vperm.slane %v963, 0
        %v975 = vsel %vm329, %v956, 0
        %977 = vmatpush.msra.mxu0 0.0
        %978 = vmatpush.msra.mxu0 0.0
        %979 = vmatpush.msra.mxu0 0.0
        %980 = vmatpush.msra.mxu0 0.0
        %981 = vmatpush.msra.mxu0 0.0
        %982 = vmatpush.msra.mxu0 0.0
        %983 = vmatpush.msra.mxu0 0.0
        %984 = vmatpush.msra.mxu0 0.0
        %985 = vmatpush.msra.mxu0 0.0
        %986 = vmatpush.msra.mxu0 0.0
        %987 = vmatpush.msra.mxu0 0.0
        %988 = vmatpush.msra.mxu0 0.0
        %989 = vmatpush.msra.mxu0 %v961
        %990 = vmatpush.msra.mxu0 %v960
        %991 = vmatpush.msra.mxu0 %v959
        %992 = vmatpush.msra.mxu0 %v958
        %993 = vmatmul.f32.gmra.mxu0 %v975
        %v994 = vpop.f32.mrf.mxu0
        %v995 = vadd.f32 %v972, %v994
        %996 = vdwg.mxu0
        %998 = vrot.lane.b32.xlu0 %v995, 96
        %v999 = vpop.permute.xlu0 %998
        %v1000 = vsel %vm356, %v995, 0
        %v1002 = vsel %vm356, %v999, 0
        %1004 = vmatpush.xpose.msra.mxu0 0.0
        %1005 = vmatpush.xpose.msra.mxu0 0.0
        %1006 = vmatpush.xpose.msra.mxu0 0.0
        %1007 = vmatpush.xpose.msra.mxu0 0.0
        %1008 = vmatpush.xpose.msra.mxu0 0.0
        %1009 = vmatpush.xpose.msra.mxu0 0.0
        %1010 = vmatpush.xpose.msra.mxu0 0.0
        %1011 = vmatpush.xpose.msra.mxu0 0.0
        %1012 = vmatpush.xpose.msra.mxu0 0.0
        %1013 = vmatpush.xpose.msra.mxu0 0.0
        %1014 = vmatpush.xpose.msra.mxu0 0.0
        %1015 = vmatpush.xpose.msra.mxu0 0.0
        %1016 = vmatpush.xpose.msra.mxu0 0.0
        %1017 = vmatpush.xpose.msra.mxu0 0.0
        %1018 = vmatpush.xpose.msra.mxu0 0.0
        %1019 = vmatpush.xpose.msra.mxu0 %v1002
        %1020 = vmatmul.f32.gmra.mxu0 %v1000
        %v1021 = vpop.f32.mrf.mxu0
        %v1022 = vadd.f32 0.0, %v1021
        %1023 = vdwg.mxu0
        %v1024 = vmul.f32 %v1022, 0.5
        %v1025 = vadd.f32 %v1024, %v314
        %v1026 = vsel %vm383, %v1025, -inf
        %1027 = vmax.xlane.f32.xlu0 %v1026
        %v1028 = vpop.xlane.xlu0 %1027
        %v1029 = vsub.f32 %v1025, %v1028
        %v1030 = vmul.f32 %v1029, 1.442695
        %v1031 = vpow.pop %v1030
        %v1032 = vsel %vm383, %v1031, 0.0
        %1033 = vadd.xlane.f32.xlu0 %v1032
        %v1034 = vpop.xlane.xlu0 %1033
        %v1035 = vrcp.pop %v1034
        %v1036 = vmul.f32 %v1031, %v1035
        %1037 = vrot.lane.b32.xlu0 %v995, 64
        %v1038 = vpop.permute.xlu0 %1037
        %v1041 = vsel %vm383, %v1036, 0
        %1043 = vmatpush.msra.mxu0 0.0
        %1044 = vmatpush.msra.mxu0 0.0
        %1045 = vmatpush.msra.mxu0 0.0
        %1046 = vmatpush.msra.mxu0 0.0
        %1047 = vmatpush.msra.mxu0 0.0
        %1048 = vmatpush.msra.mxu0 0.0
        %1049 = vmatpush.msra.mxu0 0.0
        %1050 = vmatpush.msra.mxu0 0.0
        %1051 = vmatpush.msra.mxu0 0.0
        %1052 = vmatpush.msra.mxu0 0.0
        %1053 = vmatpush.msra.mxu0 0.0
        %1054 = vmatpush.msra.mxu0 0.0
        %1055 = vmatpush.msra.mxu0 0.0
        %1056 = vmatpush.msra.mxu0 0.0
        %1057 = vmatpush.msra.mxu0 0.0
        %1058 = vmatpush.msra.mxu0 %v1038
        %1059 = vmatmul.f32.gmra.mxu0 %v1041
        %v1060 = vpop.f32.mrf.mxu0
        %v1061 = vadd.f32 0.0, %v1060
        %1062 = vdwg.mxu0
        %1063 = vrot.lane.b32.xlu0 %v995, 124
        %v1064 = vpop.permute.xlu0 %1063
        %1065 = vrot.lane.b32.xlu0 %v995, 92
        %v1066 = vpop.permute.xlu0 %1065
        %v1067 = vsel %vm356, %v1064, 0
        %v1069 = vsel %vm356, %v1066, 0
        %1071 = vmatpush.xpose.msra.mxu0 0.0
        %1072 = vmatpush.xpose.msra.mxu0 0.0
        %1073 = vmatpush.xpose.msra.mxu0 0.0
        %1074 = vmatpush.xpose.msra.mxu0 0.0
        %1075 = vmatpush.xpose.msra.mxu0 0.0
        %1076 = vmatpush.xpose.msra.mxu0 0.0
        %1077 = vmatpush.xpose.msra.mxu0 0.0
        %1078 = vmatpush.xpose.msra.mxu0 0.0
        %1079 = vmatpush.xpose.msra.mxu0 0.0
        %1080 = vmatpush.xpose.msra.mxu0 0.0
        %1081 = vmatpush.xpose.msra.mxu0 0.0
        %1082 = vmatpush.xpose.msra.mxu0 0.0
        %1083 = vmatpush.xpose.msra.mxu0 0.0
        %1084 = vmatpush.xpose.msra.mxu0 0.0
        %1085 = vmatpush.xpose.msra.mxu0 0.0
        %1086 = vmatpush.xpose.msra.mxu0 %v1069
        %1087 = vmatmul.f32.gmra.mxu0 %v1067
        %v1088 = vpop.f32.mrf.mxu0
        %v1089 = vadd.f32 0.0, %v1088
        %1090 = vdwg.mxu0
        %v1091 = vmul.f32 %v1089, 0.5
        %v1092 = vadd.f32 %v1091, %v314
        %v1093 = vsel %vm383, %v1092, -inf
        %1094 = vmax.xlane.f32.xlu0 %v1093
        %v1095 = vpop.xlane.xlu0 %1094
        %v1096 = vsub.f32 %v1092, %v1095
        %v1097 = vmul.f32 %v1096, 1.442695
        %v1098 = vpow.pop %v1097
        %v1099 = vsel %vm383, %v1098, 0.0
        %1100 = vadd.xlane.f32.xlu0 %v1099
        %v1101 = vpop.xlane.xlu0 %1100
        %v1102 = vrcp.pop %v1101
        %v1103 = vmul.f32 %v1098, %v1102
        %1104 = vrot.lane.b32.xlu0 %v995, 60
        %v1105 = vpop.permute.xlu0 %1104
        %v1108 = vsel %vm383, %v1103, 0
        %1110 = vmatpush.msra.mxu0 0.0
        %1111 = vmatpush.msra.mxu0 0.0
        %1112 = vmatpush.msra.mxu0 0.0
        %1113 = vmatpush.msra.mxu0 0.0
        %1114 = vmatpush.msra.mxu0 0.0
        %1115 = vmatpush.msra.mxu0 0.0
        %1116 = vmatpush.msra.mxu0 0.0
        %1117 = vmatpush.msra.mxu0 0.0
        %1118 = vmatpush.msra.mxu0 0.0
        %1119 = vmatpush.msra.mxu0 0.0
        %1120 = vmatpush.msra.mxu0 0.0
        %1121 = vmatpush.msra.mxu0 0.0
        %1122 = vmatpush.msra.mxu0 0.0
        %1123 = vmatpush.msra.mxu0 0.0
        %1124 = vmatpush.msra.mxu0 0.0
        %1125 = vmatpush.msra.mxu0 %v1105
        %1126 = vmatmul.f32.gmra.mxu0 %v1108
        %v1127 = vpop.f32.mrf.mxu0
        %v1128 = vadd.f32 0.0, %v1127
        %1129 = vdwg.mxu0
        %1130 = vrot.lane.b32.xlu0 %v995, 120
        %v1131 = vpop.permute.xlu0 %1130
        %1132 = vrot.lane.b32.xlu0 %v995, 88
        %v1133 = vpop.permute.xlu0 %1132
        %v1134 = vsel %vm356, %v1131, 0
        %v1136 = vsel %vm356, %v1133, 0
        %1138 = vmatpush.xpose.msra.mxu0 0.0
        %1139 = vmatpush.xpose.msra.mxu0 0.0
        %1140 = vmatpush.xpose.msra.mxu0 0.0
        %1141 = vmatpush.xpose.msra.mxu0 0.0
        %1142 = vmatpush.xpose.msra.mxu0 0.0
        %1143 = vmatpush.xpose.msra.mxu0 0.0
        %1144 = vmatpush.xpose.msra.mxu0 0.0
        %1145 = vmatpush.xpose.msra.mxu0 0.0
        %1146 = vmatpush.xpose.msra.mxu0 0.0
        %1147 = vmatpush.xpose.msra.mxu0 0.0
        %1148 = vmatpush.xpose.msra.mxu0 0.0
        %1149 = vmatpush.xpose.msra.mxu0 0.0
        %1150 = vmatpush.xpose.msra.mxu0 0.0
        %1151 = vmatpush.xpose.msra.mxu0 0.0
        %1152 = vmatpush.xpose.msra.mxu0 0.0
        %1153 = vmatpush.xpose.msra.mxu0 %v1136
        %1154 = vmatmul.f32.gmra.mxu0 %v1134
        %v1155 = vpop.f32.mrf.mxu0
        %v1156 = vadd.f32 0.0, %v1155
        %1157 = vdwg.mxu0
        %v1158 = vmul.f32 %v1156, 0.5
        %v1159 = vadd.f32 %v1158, %v314
        %v1160 = vsel %vm383, %v1159, -inf
        %1161 = vmax.xlane.f32.xlu0 %v1160
        %v1162 = vpop.xlane.xlu0 %1161
        %v1163 = vsub.f32 %v1159, %v1162
        %v1164 = vmul.f32 %v1163, 1.442695
        %v1165 = vpow.pop %v1164
        %v1166 = vsel %vm383, %v1165, 0.0
        %1167 = vadd.xlane.f32.xlu0 %v1166
        %v1168 = vpop.xlane.xlu0 %1167
        %v1169 = vrcp.pop %v1168
        %v1170 = vmul.f32 %v1165, %v1169
        %1171 = vrot.lane.b32.xlu0 %v995, 56
        %v1172 = vpop.permute.xlu0 %1171
        %v1175 = vsel %vm383, %v1170, 0
        %1177 = vmatpush.msra.mxu0 0.0
        %1178 = vmatpush.msra.mxu0 0.0
        %1179 = vmatpush.msra.mxu0 0.0
        %1180 = vmatpush.msra.mxu0 0.0
        %1181 = vmatpush.msra.mxu0 0.0
        %1182 = vmatpush.msra.mxu0 0.0
        %1183 = vmatpush.msra.mxu0 0.0
        %1184 = vmatpush.msra.mxu0 0.0
        %1185 = vmatpush.msra.mxu0 0.0
        %1186 = vmatpush.msra.mxu0 0.0
        %1187 = vmatpush.msra.mxu0 0.0
        %1188 = vmatpush.msra.mxu0 0.0
        %1189 = vmatpush.msra.mxu0 0.0
        %1190 = vmatpush.msra.mxu0 0.0
        %1191 = vmatpush.msra.mxu0 0.0
        %1192 = vmatpush.msra.mxu0 %v1172
        %1193 = vmatmul.f32.gmra.mxu0 %v1175
        %v1194 = vpop.f32.mrf.mxu0
        %v1195 = vadd.f32 0.0, %v1194
        %1196 = vdwg.mxu0
        %1197 = vrot.lane.b32.xlu0 %v995, 116
        %v1198 = vpop.permute.xlu0 %1197
        %1199 = vrot.lane.b32.xlu0 %v995, 84
        %v1200 = vpop.permute.xlu0 %1199
        %v1201 = vsel %vm356, %v1198, 0
        %v1203 = vsel %vm356, %v1200, 0
        %1205 = vmatpush.xpose.msra.mxu0 0.0
        %1206 = vmatpush.xpose.msra.mxu0 0.0
        %1207 = vmatpush.xpose.msra.mxu0 0.0
        %1208 = vmatpush.xpose.msra.mxu0 0.0
        %1209 = vmatpush.xpose.msra.mxu0 0.0
        %1210 = vmatpush.xpose.msra.mxu0 0.0
        %1211 = vmatpush.xpose.msra.mxu0 0.0
        %1212 = vmatpush.xpose.msra.mxu0 0.0
        %1213 = vmatpush.xpose.msra.mxu0 0.0
        %1214 = vmatpush.xpose.msra.mxu0 0.0
        %1215 = vmatpush.xpose.msra.mxu0 0.0
        %1216 = vmatpush.xpose.msra.mxu0 0.0
        %1217 = vmatpush.xpose.msra.mxu0 0.0
        %1218 = vmatpush.xpose.msra.mxu0 0.0
        %1219 = vmatpush.xpose.msra.mxu0 0.0
        %1220 = vmatpush.xpose.msra.mxu0 %v1203
        %1221 = vmatmul.f32.gmra.mxu0 %v1201
        %v1222 = vpop.f32.mrf.mxu0
        %v1223 = vadd.f32 0.0, %v1222
        %1224 = vdwg.mxu0
        %v1225 = vmul.f32 %v1223, 0.5
        %v1226 = vadd.f32 %v1225, %v314
        %v1227 = vsel %vm383, %v1226, -inf
        %1228 = vmax.xlane.f32.xlu0 %v1227
        %v1229 = vpop.xlane.xlu0 %1228
        %v1230 = vsub.f32 %v1226, %v1229
        %v1231 = vmul.f32 %v1230, 1.442695
        %v1232 = vpow.pop %v1231
        %v1233 = vsel %vm383, %v1232, 0.0
        %1234 = vadd.xlane.f32.xlu0 %v1233
        %v1235 = vpop.xlane.xlu0 %1234
        %v1236 = vrcp.pop %v1235
        %v1237 = vmul.f32 %v1232, %v1236
        %1238 = vrot.lane.b32.xlu0 %v995, 52
        %v1239 = vpop.permute.xlu0 %1238
        %v1242 = vsel %vm383, %v1237, 0
        %1244 = vmatpush.msra.mxu0 0.0
        %1245 = vmatpush.msra.mxu0 0.0
        %1246 = vmatpush.msra.mxu0 0.0
        %1247 = vmatpush.msra.mxu0 0.0
        %1248 = vmatpush.msra.mxu0 0.0
        %1249 = vmatpush.msra.mxu0 0.0
        %1250 = vmatpush.msra.mxu0 0.0
        %1251 = vmatpush.msra.mxu0 0.0
        %1252 = vmatpush.msra.mxu0 0.0
        %1253 = vmatpush.msra.mxu0 0.0
        %1254 = vmatpush.msra.mxu0 0.0
        %1255 = vmatpush.msra.mxu0 0.0
        %1256 = vmatpush.msra.mxu0 0.0
        %1257 = vmatpush.msra.mxu0 0.0
        %1258 = vmatpush.msra.mxu0 0.0
        %1259 = vmatpush.msra.mxu0 %v1239
        %1260 = vmatmul.f32.gmra.mxu0 %v1242
        %v1261 = vpop.f32.mrf.mxu0
        %v1262 = vadd.f32 0.0, %v1261
        %1263 = vdwg.mxu0
        %1264 = vrot.lane.b32.xlu0 %v995, 112
        %v1265 = vpop.permute.xlu0 %1264
        %1266 = vrot.lane.b32.xlu0 %v995, 80
        %v1267 = vpop.permute.xlu0 %1266
        %v1268 = vsel %vm356, %v1265, 0
        %v1270 = vsel %vm356, %v1267, 0
        %1272 = vmatpush.xpose.msra.mxu0 0.0
        %1273 = vmatpush.xpose.msra.mxu0 0.0
        %1274 = vmatpush.xpose.msra.mxu0 0.0
        %1275 = vmatpush.xpose.msra.mxu0 0.0
        %1276 = vmatpush.xpose.msra.mxu0 0.0
        %1277 = vmatpush.xpose.msra.mxu0 0.0
        %1278 = vmatpush.xpose.msra.mxu0 0.0
        %1279 = vmatpush.xpose.msra.mxu0 0.0
        %1280 = vmatpush.xpose.msra.mxu0 0.0
        %1281 = vmatpush.xpose.msra.mxu0 0.0
        %1282 = vmatpush.xpose.msra.mxu0 0.0
        %1283 = vmatpush.xpose.msra.mxu0 0.0
        %1284 = vmatpush.xpose.msra.mxu0 0.0
        %1285 = vmatpush.xpose.msra.mxu0 0.0
        %1286 = vmatpush.xpose.msra.mxu0 0.0
        %1287 = vmatpush.xpose.msra.mxu0 %v1270
        %1288 = vmatmul.f32.gmra.mxu0 %v1268
        %v1289 = vpop.f32.mrf.mxu0
        %v1290 = vadd.f32 0.0, %v1289
        %1291 = vdwg.mxu0
        %v1292 = vmul.f32 %v1290, 0.5
        %v1293 = vadd.f32 %v1292, %v314
        %v1294 = vsel %vm383, %v1293, -inf
        %1295 = vmax.xlane.f32.xlu0 %v1294
        %v1296 = vpop.xlane.xlu0 %1295
        %v1297 = vsub.f32 %v1293, %v1296
        %v1298 = vmul.f32 %v1297, 1.442695
        %v1299 = vpow.pop %v1298
        %v1300 = vsel %vm383, %v1299, 0.0
        %1301 = vadd.xlane.f32.xlu0 %v1300
        %v1302 = vpop.xlane.xlu0 %1301
        %v1303 = vrcp.pop %v1302
        %v1304 = vmul.f32 %v1299, %v1303
        %1305 = vrot.lane.b32.xlu0 %v995, 48
        %v1306 = vpop.permute.xlu0 %1305
        %v1309 = vsel %vm383, %v1304, 0
        %1311 = vmatpush.msra.mxu0 0.0
        %1312 = vmatpush.msra.mxu0 0.0
        %1313 = vmatpush.msra.mxu0 0.0
        %1314 = vmatpush.msra.mxu0 0.0
        %1315 = vmatpush.msra.mxu0 0.0
        %1316 = vmatpush.msra.mxu0 0.0
        %1317 = vmatpush.msra.mxu0 0.0
        %1318 = vmatpush.msra.mxu0 0.0
        %1319 = vmatpush.msra.mxu0 0.0
        %1320 = vmatpush.msra.mxu0 0.0
        %1321 = vmatpush.msra.mxu0 0.0
        %1322 = vmatpush.msra.mxu0 0.0
        %1323 = vmatpush.msra.mxu0 0.0
        %1324 = vmatpush.msra.mxu0 0.0
        %1325 = vmatpush.msra.mxu0 0.0
        %1326 = vmatpush.msra.mxu0 %v1306
        %1327 = vmatmul.f32.gmra.mxu0 %v1309
        %v1328 = vpop.f32.mrf.mxu0
        %v1329 = vadd.f32 0.0, %v1328
        %1330 = vdwg.mxu0
        %1331 = vrot.lane.b32.xlu0 %v995, 108
        %v1332 = vpop.permute.xlu0 %1331
        %1333 = vrot.lane.b32.xlu0 %v995, 76
        %v1334 = vpop.permute.xlu0 %1333
        %v1335 = vsel %vm356, %v1332, 0
        %v1337 = vsel %vm356, %v1334, 0
        %1339 = vmatpush.xpose.msra.mxu0 0.0
        %1340 = vmatpush.xpose.msra.mxu0 0.0
        %1341 = vmatpush.xpose.msra.mxu0 0.0
        %1342 = vmatpush.xpose.msra.mxu0 0.0
        %1343 = vmatpush.xpose.msra.mxu0 0.0
        %1344 = vmatpush.xpose.msra.mxu0 0.0
        %1345 = vmatpush.xpose.msra.mxu0 0.0
        %1346 = vmatpush.xpose.msra.mxu0 0.0
        %1347 = vmatpush.xpose.msra.mxu0 0.0
        %1348 = vmatpush.xpose.msra.mxu0 0.0
        %1349 = vmatpush.xpose.msra.mxu0 0.0
        %1350 = vmatpush.xpose.msra.mxu0 0.0
        %1351 = vmatpush.xpose.msra.mxu0 0.0
        %1352 = vmatpush.xpose.msra.mxu0 0.0
        %1353 = vmatpush.xpose.msra.mxu0 0.0
        %1354 = vmatpush.xpose.msra.mxu0 %v1337
        %1355 = vmatmul.f32.gmra.mxu0 %v1335
        %v1356 = vpop.f32.mrf.mxu0
        %v1357 = vadd.f32 0.0, %v1356
        %1358 = vdwg.mxu0
        %v1359 = vmul.f32 %v1357, 0.5
        %v1360 = vadd.f32 %v1359, %v314
        %v1361 = vsel %vm383, %v1360, -inf
        %1362 = vmax.xlane.f32.xlu0 %v1361
        %v1363 = vpop.xlane.xlu0 %1362
        %v1364 = vsub.f32 %v1360, %v1363
        %v1365 = vmul.f32 %v1364, 1.442695
        %v1366 = vpow.pop %v1365
        %v1367 = vsel %vm383, %v1366, 0.0
        %1368 = vadd.xlane.f32.xlu0 %v1367
        %v1369 = vpop.xlane.xlu0 %1368
        %v1370 = vrcp.pop %v1369
        %v1371 = vmul.f32 %v1366, %v1370
        %1372 = vrot.lane.b32.xlu0 %v995, 44
        %v1373 = vpop.permute.xlu0 %1372
        %v1376 = vsel %vm383, %v1371, 0
        %1378 = vmatpush.msra.mxu0 0.0
        %1379 = vmatpush.msra.mxu0 0.0
        %1380 = vmatpush.msra.mxu0 0.0
        %1381 = vmatpush.msra.mxu0 0.0
        %1382 = vmatpush.msra.mxu0 0.0
        %1383 = vmatpush.msra.mxu0 0.0
        %1384 = vmatpush.msra.mxu0 0.0
        %1385 = vmatpush.msra.mxu0 0.0
        %1386 = vmatpush.msra.mxu0 0.0
        %1387 = vmatpush.msra.mxu0 0.0
        %1388 = vmatpush.msra.mxu0 0.0
        %1389 = vmatpush.msra.mxu0 0.0
        %1390 = vmatpush.msra.mxu0 0.0
        %1391 = vmatpush.msra.mxu0 0.0
        %1392 = vmatpush.msra.mxu0 0.0
        %1393 = vmatpush.msra.mxu0 %v1373
        %1394 = vmatmul.f32.gmra.mxu0 %v1376
        %v1395 = vpop.f32.mrf.mxu0
        %v1396 = vadd.f32 0.0, %v1395
        %1397 = vdwg.mxu0
        %1398 = vrot.lane.b32.xlu0 %v995, 104
        %v1399 = vpop.permute.xlu0 %1398
        %1400 = vrot.lane.b32.xlu0 %v995, 72
        %v1401 = vpop.permute.xlu0 %1400
        %v1402 = vsel %vm356, %v1399, 0
        %v1404 = vsel %vm356, %v1401, 0
        %1406 = vmatpush.xpose.msra.mxu0 0.0
        %1407 = vmatpush.xpose.msra.mxu0 0.0
        %1408 = vmatpush.xpose.msra.mxu0 0.0
        %1409 = vmatpush.xpose.msra.mxu0 0.0
        %1410 = vmatpush.xpose.msra.mxu0 0.0
        %1411 = vmatpush.xpose.msra.mxu0 0.0
        %1412 = vmatpush.xpose.msra.mxu0 0.0
        %1413 = vmatpush.xpose.msra.mxu0 0.0
        %1414 = vmatpush.xpose.msra.mxu0 0.0
        %1415 = vmatpush.xpose.msra.mxu0 0.0
        %1416 = vmatpush.xpose.msra.mxu0 0.0
        %1417 = vmatpush.xpose.msra.mxu0 0.0
        %1418 = vmatpush.xpose.msra.mxu0 0.0
        %1419 = vmatpush.xpose.msra.mxu0 0.0
        %1420 = vmatpush.xpose.msra.mxu0 0.0
        %1421 = vmatpush.xpose.msra.mxu0 %v1404
        %1422 = vmatmul.f32.gmra.mxu0 %v1402
        %v1423 = vpop.f32.mrf.mxu0
        %v1424 = vadd.f32 0.0, %v1423
        %1425 = vdwg.mxu0
        %v1426 = vmul.f32 %v1424, 0.5
        %v1427 = vadd.f32 %v1426, %v314
        %v1428 = vsel %vm383, %v1427, -inf
        %1429 = vmax.xlane.f32.xlu0 %v1428
        %v1430 = vpop.xlane.xlu0 %1429
        %v1431 = vsub.f32 %v1427, %v1430
        %v1432 = vmul.f32 %v1431, 1.442695
        %v1433 = vpow.pop %v1432
        %v1434 = vsel %vm383, %v1433, 0.0
        %1435 = vadd.xlane.f32.xlu0 %v1434
        %v1436 = vpop.xlane.xlu0 %1435
        %v1437 = vrcp.pop %v1436
        %v1438 = vmul.f32 %v1433, %v1437
        %1439 = vrot.lane.b32.xlu0 %v995, 40
        %v1440 = vpop.permute.xlu0 %1439
        %v1443 = vsel %vm383, %v1438, 0
        %1445 = vmatpush.msra.mxu0 0.0
        %1446 = vmatpush.msra.mxu0 0.0
        %1447 = vmatpush.msra.mxu0 0.0
        %1448 = vmatpush.msra.mxu0 0.0
        %1449 = vmatpush.msra.mxu0 0.0
        %1450 = vmatpush.msra.mxu0 0.0
        %1451 = vmatpush.msra.mxu0 0.0
        %1452 = vmatpush.msra.mxu0 0.0
        %1453 = vmatpush.msra.mxu0 0.0
        %1454 = vmatpush.msra.mxu0 0.0
        %1455 = vmatpush.msra.mxu0 0.0
        %1456 = vmatpush.msra.mxu0 0.0
        %1457 = vmatpush.msra.mxu0 0.0
        %1458 = vmatpush.msra.mxu0 0.0
        %1459 = vmatpush.msra.mxu0 0.0
        %1460 = vmatpush.msra.mxu0 %v1440
        %1461 = vmatmul.f32.gmra.mxu0 %v1443
        %v1462 = vpop.f32.mrf.mxu0
        %v1463 = vadd.f32 0.0, %v1462
        %1464 = vdwg.mxu0
        %1465 = vrot.lane.b32.xlu0 %v995, 100
        %v1466 = vpop.permute.xlu0 %1465
        %1467 = vrot.lane.b32.xlu0 %v995, 68
        %v1468 = vpop.permute.xlu0 %1467
        %v1469 = vsel %vm356, %v1466, 0
        %v1471 = vsel %vm356, %v1468, 0
        %1473 = vmatpush.xpose.msra.mxu0 0.0
        %1474 = vmatpush.xpose.msra.mxu0 0.0
        %1475 = vmatpush.xpose.msra.mxu0 0.0
        %1476 = vmatpush.xpose.msra.mxu0 0.0
        %1477 = vmatpush.xpose.msra.mxu0 0.0
        %1478 = vmatpush.xpose.msra.mxu0 0.0
        %1479 = vmatpush.xpose.msra.mxu0 0.0
        %1480 = vmatpush.xpose.msra.mxu0 0.0
        %1481 = vmatpush.xpose.msra.mxu0 0.0
        %1482 = vmatpush.xpose.msra.mxu0 0.0
        %1483 = vmatpush.xpose.msra.mxu0 0.0
        %1484 = vmatpush.xpose.msra.mxu0 0.0
        %1485 = vmatpush.xpose.msra.mxu0 0.0
        %1486 = vmatpush.xpose.msra.mxu0 0.0
        %1487 = vmatpush.xpose.msra.mxu0 0.0
        %1488 = vmatpush.xpose.msra.mxu0 %v1471
        %1489 = vmatmul.f32.gmra.mxu0 %v1469
        %v1490 = vpop.f32.mrf.mxu0
        %v1491 = vadd.f32 0.0, %v1490
        %1492 = vdwg.mxu0
        %v1493 = vmul.f32 %v1491, 0.5
        %v1494 = vadd.f32 %v1493, %v314
        %v1495 = vsel %vm383, %v1494, -inf
        %1496 = vmax.xlane.f32.xlu0 %v1495
        %v1497 = vpop.xlane.xlu0 %1496
        %v1498 = vsub.f32 %v1494, %v1497
        %v1499 = vmul.f32 %v1498, 1.442695
        %v1500 = vpow.pop %v1499
        %v1501 = vsel %vm383, %v1500, 0.0
        %1502 = vadd.xlane.f32.xlu0 %v1501
        %v1503 = vpop.xlane.xlu0 %1502
        %v1504 = vrcp.pop %v1503
        %v1505 = vmul.f32 %v1500, %v1504
        %1506 = vrot.lane.b32.xlu0 %v995, 36
        %v1507 = vpop.permute.xlu0 %1506
        %v1510 = vsel %vm383, %v1505, 0
        %1512 = vmatpush.msra.mxu0 0.0
        %1513 = vmatpush.msra.mxu0 0.0
        %1514 = vmatpush.msra.mxu0 0.0
        %1515 = vmatpush.msra.mxu0 0.0
        %1516 = vmatpush.msra.mxu0 0.0
        %1517 = vmatpush.msra.mxu0 0.0
        %1518 = vmatpush.msra.mxu0 0.0
        %1519 = vmatpush.msra.mxu0 0.0
        %1520 = vmatpush.msra.mxu0 0.0
        %1521 = vmatpush.msra.mxu0 0.0
        %1522 = vmatpush.msra.mxu0 0.0
        %1523 = vmatpush.msra.mxu0 0.0
        %1524 = vmatpush.msra.mxu0 0.0
        %1525 = vmatpush.msra.mxu0 0.0
        %1526 = vmatpush.msra.mxu0 0.0
        %1527 = vmatpush.msra.mxu0 %v1507
        %1528 = vmatmul.f32.gmra.mxu0 %v1510
        %v1529 = vpop.f32.mrf.mxu0
        %v1530 = vadd.f32 0.0, %v1529
        %1531 = vdwg.mxu0
        %1533 = vrot.lane.b32.xlu0 %v1128, 4
        %v1534 = vpop.permute.xlu0 %1533
        %1537 = vrot.lane.b32.xlu0 %v1195, 8
        %v1538 = vpop.permute.xlu0 %1537
        %1541 = vrot.lane.b32.xlu0 %v1262, 12
        %v1542 = vpop.permute.xlu0 %1541
        %1545 = vrot.lane.b32.xlu0 %v1329, 16
        %v1546 = vpop.permute.xlu0 %1545
        %1549 = vrot.lane.b32.xlu0 %v1396, 20
        %v1550 = vpop.permute.xlu0 %1549
        %1553 = vrot.lane.b32.xlu0 %v1463, 24
        %v1554 = vpop.permute.xlu0 %1553
        %1557 = vrot.lane.b32.xlu0 %v1530, 28
        %v1558 = vpop.permute.xlu0 %1557
        %v1560 = vsel %vm356, %v1061, %v1534
        %v1561 = vsel %vm383, %v1560, %v1538
        %v1562 = vsel %vm920, %v1561, %v1542
        %v1563 = vsel %vm922, %v1562, %v1546
        %v1564 = vsel %vm924, %v1563, %v1550
        %v1565 = vsel %vm926, %v1564, %v1554
        %v1566 = vsel %vm928, %v1565, %v1558
        %v1568 = vperm.slane %v970, 0
        %v1571 = vsel %vm329, %v1566, 0
        %1573 = vmatpush.msra.mxu0 0.0
        %1574 = vmatpush.msra.mxu0 0.0
        %1575 = vmatpush.msra.mxu0 0.0
        %1576 = vmatpush.msra.mxu0 0.0
        %1577 = vmatpush.msra.mxu0 0.0
        %1578 = vmatpush.msra.mxu0 0.0
        %1579 = vmatpush.msra.mxu0 0.0
        %1580 = vmatpush.msra.mxu0 0.0
        %1581 = vmatpush.msra.mxu0 0.0
        %1582 = vmatpush.msra.mxu0 0.0
        %1583 = vmatpush.msra.mxu0 0.0
        %1584 = vmatpush.msra.mxu0 0.0
        %1585 = vmatpush.msra.mxu0 %v968
        %1586 = vmatpush.msra.mxu0 %v967
        %1587 = vmatpush.msra.mxu0 %v966
        %1588 = vmatpush.msra.mxu0 %v965
        %1589 = vmatmul.f32.gmra.mxu0 %v1571
        %v1590 = vpop.f32.mrf.mxu0
        %v1591 = vadd.f32 %v1568, %v1590
        %1592 = vdwg.mxu0
        %v1593 = vadd.f32 %v1591, %v956
        %1594 = vst.msk [vmem:[%s313] sm:$0xff] %vm329, %v1593
        %p1595 = scmp.lt.s32.totalorder %s20, 1
        %s1596 = scalar_select %p1595, %s20, 1
        %s1597 = smul.addr %s1596, 8
        %s1598 = scalar_lea.vmem %s6, %s1597
        // Predicated region
        $region61: #{attation_cov_forward.2} parent=43 // pred_check
          %p1599 = pneg %p169
        $region62: #{attation_cov_forward.2} parent=43 // pred_check_branch
          %1601 = sbr.rel (%p1599) target = $region64
        $region63: #{attation_cov_forward.2} parent=43 // pred_region
          _
        $region64: #{attation_cov_forward.2} parent=43 // pred_fallthru
          _
      $region44: #{attation_cov_forward.2} parent=5 // pred_fallthru
        _
      %p1602 = scmp.le.s32.totalorder 2, %s15
      // Predicated region
      $region65: #{attation_cov_forward.2} parent=5 // pred_check
        %p1603 = pneg %p1602
      $region66: #{attation_cov_forward.2} parent=5 // pred_check_branch
        %1605 = sbr.rel (%p1603) target = $region68
      $region67: #{attation_cov_forward.2} parent=5 // pred_region
        %s1606 = ssub.s32 %s15, 2
        // Predicated region
        $region69: #{attation_cov_forward.2} parent=67 // pred_check
          %p1607 = pneg %p175
        $region70: #{attation_cov_forward.2} parent=67 // pred_check_branch
          %1609 = sbr.rel (%p1607) target = $region72
        $region71: #{attation_cov_forward.2} parent=67 // pred_region
          %p1610 = scmp.lt.s32.totalorder %s21, 1
          %s1611 = scalar_select %p1610, %s21, 1
          %s1612 = smul.addr %s1611, 8
          %s1613 = scalar_lea.vmem %s6, %s1612
        $region72: #{attation_cov_forward.2} parent=67 // pred_fallthru
          _
      $region68: #{attation_cov_forward.2} parent=5 // pred_fallthru
        _
    $region6: #{attation_cov_forward.2} parent=1 // loop_footer
      %s19 = sadd.s32 1, %s15
    $region7: #{attation_cov_forward.2} parent=1 // loop_footer_branch
      %14 = sbr.rel target = $region3
    $region8: #{attation_cov_forward.2} parent=1 // loop_exit
      _
    %1614 = vsyncpa [#allocation3], 1
    %s1615 = scalar_lea.sflag [#allocation3], 1
    %1616 = vsyncpa %s1615, 1
    %1617 = vsyncpa [#allocation5], 1
    %1618 = vsyncpa [#allocation8], 1

</llo_original>
